<compile_context>
chip_gen: v5e
topology: v5e:2x2
jax: 0.10.0
libtpu: 0.0.40
codegen_flags: <defaults>
</compile_context>

<pallas_src>
import functools

import jax
import jax.numpy as jnp
from jax.experimental import pallas as pl
from jax.experimental.pallas import tpu as pltpu


# ----------------------------- Pallas kernel -------------------------------- #
def _lstm_encoder_kernel(x_ref, w_ref, out_ref):
    """Interleaved 2-layer LSTM over a short static sequence, fully in VMEM.

    x_ref:   (T, Din)        effective time-major input sequence
    w_ref:   (2H+Din+1, 8H)  packed weight slab, lane layout [i0 i1 f0 f1 g0 g1 o0 o1]
                             rows: [ W_big (2H) | Wih0_ext (Din) | b_ext (1) ]
                             W_big rows 0..H-1  : {Whh0 | Wih1} per gate chunk
                             W_big rows H..2H-1 : {  0  | Whh1} per gate chunk
                             'g'-gate columns pre-scaled by 2 (tanh via sigmoid).
    out_ref: (4, H)          rows [h0, h1, c0, c1] (final per-layer states)
    """
    T, Din = x_ref.shape
    H = out_ref.shape[1]
    H2 = 2 * H

    # Static-offset views of the packed slab (loaded once, outside the recurrence).
    w_big = w_ref[0:H2, :]                          # (2H, 8H) fused recurrent weights
    wih0e = w_ref[H2:H2 + Din, :]                   # (Din, 8H) layer-0 input weights (layer-1 cols = 0)
    b_ext = w_ref[H2 + Din:H2 + Din + 1, :]         # (1, 8H)  combined biases, both layers

    # Batched layer-0 input projection for ALL timesteps:
    # one (T, Din)@(Din, 8H) MXU matmul hoisted out of the recurrence.
    gin = jnp.dot(x_ref[...], wih0e, preferred_element_type=jnp.float32) + b_ext    # (T, 8H)

    def fused_step(g_add, h, c):
        # One step of BOTH layers on the packed [layer0 | layer1] lanes:
        #   lanes [0,H)  -> layer-0 cell,  lanes [H,2H) -> layer-1 cell.
        g = g_add + jnp.dot(h, w_big, preferred_element_type=jnp.float32)   # (1, 8H)
        s = jax.nn.sigmoid(g)                       # single EUP region; g-cols pre-scaled x2
        i = s[:, 0:H2]                              # [i0 | i1]
        f = s[:, H2:2 * H2]                         # [f0 | f1]
        gg = 2.0 * s[:, 2 * H2:3 * H2] - 1.0        # == tanh(original g preactivation)
        o = s[:, 3 * H2:4 * H2]                     # [o0 | o1]
        c_new = f * c + i * gg
        h_new = o * jnp.tanh(c_new)
        return h_new, c_new

    zeros2 = jnp.zeros((1, H2), jnp.float32)
    lane = jax.lax.broadcasted_iota(jnp.int32, (1, H2), 1)
    layer0_half = lane < H                          # mask selecting the layer-0 lanes

    # Iteration 0: only layer-0 step 0 exists; layer-1 must stay at zero state,
    # so its half of the (spuriously computed) update is masked back to zero.
    h, c = fused_step(gin[0:1, :], zeros2, zeros2)
    h = jnp.where(layer0_half, h, 0.0)
    c = jnp.where(layer0_half, c, 0.0)

    # Interleaved steady state: iteration k = layer-0 step k + layer-1 step k-1.
    # T is small & static -> fully unrolled so the LLO scheduler overlaps the two
    # (independent) halves and the MXU/EUP tails of consecutive steps.
    for k in range(1, T):
        h, c = fused_step(gin[k:k + 1, :], h, c)

    # Here h = [h0_{T-1} | h1_{T-2}], c = [c0_{T-1} | c1_{T-2}].
    h0_f = h[:, 0:H]
    c0_f = c[:, 0:H]

    # Epilogue: layer-1 step T-1 consumes the final layer-0 output.
    # (Its layer-0 half is meaningless and discarded.)
    h, c = fused_step(b_ext, h, c)
    h1_f = h[:, H:H2]
    c1_f = c[:, H:H2]

    # Single packed output (one DMA): rows [h0, h1, c0, c1].
    out_ref[0:1, :] = h0_f
    out_ref[1:2, :] = h1_f
    out_ref[2:3, :] = c0_f
    out_ref[3:4, :] = c1_f


# ------------------------- one-time weight packing --------------------------- #
def pack_encoder_params(params, hid_dim):
    """One-time transform of PyTorch-layout LSTM weights into the kernel slab.

    Call at model load, NOT per forward call (review item: hoist weight prep).
    Returns a (2H + input_dim + 1, 8H) float32 slab.
    """
    (wih0, whh0, bih0, bhh0, wih1, whh1, bih1, bhh1) = params
    H = hid_dim
    input_dim = wih0.shape[1]

    wih0_t = wih0.T.astype(jnp.float32)      # (Din, 4H)  gate col order [i f g o]
    whh0_t = whh0.T.astype(jnp.float32)      # (H,   4H)
    wih1_t = wih1.T.astype(jnp.float32)      # (H,   4H)
    whh1_t = whh1.T.astype(jnp.float32)      # (H,   4H)
    b0 = (bih0 + bhh0).astype(jnp.float32)[None, :]    # (1, 4H)
    b1 = (bih1 + bhh1).astype(jnp.float32)[None, :]    # (1, 4H)

    def gate(w, t):                          # gate chunk t (0=i, 1=f, 2=g, 3=o)
        return w[:, t * H:(t + 1) * H]

    def interleave(w_l0, w_l1):
        # (K,4H),(K,4H) -> (K,8H) with column order [i0 i1 f0 f1 g0 g1 o0 o1].
        # The cell ('g') gate columns are pre-scaled by 2 so the kernel can use
        # tanh(x) = 2*sigmoid(2x) - 1 with a single full-width sigmoid.
        cols = []
        for t in range(4):
            sc = 2.0 if t == 2 else 1.0
            cols.append(sc * gate(w_l0, t))
            cols.append(sc * gate(w_l1, t))
        return jnp.concatenate(cols, axis=1)

    zH = jnp.zeros((H, 4 * H), jnp.float32)
    zD = jnp.zeros((input_dim, 4 * H), jnp.float32)

    w_big_top = interleave(whh0_t, wih1_t)   # h0 rows: layer-0 recurrent | layer-1 input
    w_big_bot = interleave(zH, whh1_t)       # h1 rows: zero              | layer-1 recurrent
    wih0_ext = interleave(wih0_t, zD)        # layer-0 input weights, layer-1 cols zero
    b_ext = interleave(b0, b1)               # combined biases for both layers

    slab = jnp.concatenate([w_big_top, w_big_bot, wih0_ext, b_ext], axis=0)
    return slab                              # (2H + Din + 1, 8H)


# ------------------------------- wrapper ------------------------------------ #
@functools.partial(jax.jit, static_argnames=("hid_dim",))
def encoder_forward(batch, packed_weights, *, hid_dim):
    """batch: (B, num_seq, input_dim) float32; packed_weights from pack_encoder_params.

    Returns (h_n, c_n), each (2, hid_dim) — final per-layer LSTM states,
    matching Encoder.forward's returned (encoder_hidden, encoder_cell).
    """
    B, num_seq, input_dim = batch.shape
    T = (num_seq - 1) * B
    # Effective time order of the PyTorch loop:
    # for ei in 1..num_seq-1: feed rows b = 0..B-1 of batch[:, ei, :].
    x_seq = jnp.transpose(batch[:, 1:, :], (1, 0, 2)).reshape(
        T, input_dim).astype(jnp.float32)

    vmem = pl.BlockSpec(memory_space=pltpu.MemorySpace.VMEM)
    out = pl.pallas_call(
        _lstm_encoder_kernel,
        out_shape=jax.ShapeDtypeStruct((4, hid_dim), jnp.float32),
        in_specs=[vmem, vmem],
        out_specs=vmem,
    )(x_seq, packed_weights)

    h_n = out[0:2, :]
    c_n = out[2:4, :]
    return h_n, c_n


# ------------------------- deterministic params ------------------------------ #
def init_lstm_params(key, input_dim, hid_dim):
    """Same shapes as PyTorch nn.LSTM(input_dim, hid_dim, num_layers=2)."""
    bound = 1.0 / float(hid_dim) ** 0.5
    ks = jax.random.split(key, 8)

    def u(k, shape):
        return jax.random.uniform(k, shape, jnp.float32, -bound, bound)

    wih0 = u(ks[0], (4 * hid_dim, input_dim))
    whh0 = u(ks[1], (4 * hid_dim, hid_dim))
    bih0 = u(ks[2], (4 * hid_dim,))
    bhh0 = u(ks[3], (4 * hid_dim,))
    wih1 = u(ks[4], (4 * hid_dim, hid_dim))
    whh1 = u(ks[5], (4 * hid_dim, hid_dim))
    bih1 = u(ks[6], (4 * hid_dim,))
    bhh1 = u(ks[7], (4 * hid_dim,))
    return (wih0, whh0, bih0, bhh0, wih1, whh1, bih1, bhh1)


# -------------------------- pure-JAX reference ------------------------------- #
def encoder_reference(batch, params, hid_dim):
    (wih0, whh0, bih0, bhh0, wih1, whh1, bih1, bhh1) = params
    B, num_seq, input_dim = batch.shape
    x_seq = jnp.transpose(batch[:, 1:, :], (1, 0, 2)).reshape(-1, input_dim)

    def cell(x, h, c, wih, whh, bih, bhh):
        g = x @ wih.T + bih + h @ whh.T + bhh
        i, f, gg, o = jnp.split(g, 4)
        i, f, o = jax.nn.sigmoid(i), jax.nn.sigmoid(f), jax.nn.sigmoid(o)
        gg = jnp.tanh(gg)
        c_new = f * c + i * gg
        return o * jnp.tanh(c_new), c_new

    def step(carry, x):
        h0, c0, h1, c1 = carry
        h0, c0 = cell(x, h0, c0, wih0, whh0, bih0, bhh0)
        h1, c1 = cell(h0, h1, c1, wih1, whh1, bih1, bhh1)
        return (h0, c0, h1, c1), None

    z = jnp.zeros((hid_dim,), jnp.float32)
    (h0, c0, h1, c1), _ = jax.lax.scan(step, (z, z, z, z), x_seq)
    return jnp.stack([h0, h1]), jnp.stack([c0, c1])


if __name__ == "__main__":
    # Small shapes consistent with the module:
    B, num_seq, input_dim, hid_dim = 2, 8, 4, 32

    key = jax.random.PRNGKey(0)
    k_params, k_batch = jax.random.split(key)
    params = init_lstm_params(k_params, input_dim, hid_dim)
    batch = jax.random.normal(k_batch, (B, num_seq, input_dim), jnp.float32)

    # One-time weight packing (model-load time, not per call).
    packed = jax.block_until_ready(pack_encoder_params(params, hid_dim))

    h_n, c_n = encoder_forward(batch, packed, hid_dim=hid_dim)
    jax.block_until_ready((h_n, c_n))

    h_ref, c_ref = encoder_reference(batch, params, hid_dim)
    assert h_n.shape == (2, hid_dim) and c_n.shape == (2, hid_dim)
    assert jnp.allclose(h_n, h_ref, atol=1e-5, rtol=1e-5)
    assert jnp.allclose(c_n, c_ref, atol=1e-5, rtol=1e-5)

    print("KERNEL_OK")
</pallas_src>

<mosaic_0001>
module attributes {stable_mosaic.version = 11 : i64} {
  func.func @_lstm_encoder_kernel(%arg0: memref<14x4xf32, #tpu.memory_space<vmem>>, %arg1: memref<69x256xf32, #tpu.memory_space<vmem>>, %arg2: memref<4x32xf32, #tpu.memory_space<vmem>>) attributes {dimension_semantics = [], scalar_prefetch = 0 : i64, scratch_operands = 0 : i64, tpu.core_type = #tpu.core_type<tc>} {
    %c0 = arith.constant 0 : index
    %c0_0 = arith.constant 0 : index
    %0 = vector.load %arg1[%c0, %c0_0] : memref<69x256xf32, #tpu.memory_space<vmem>>, vector<64x256xf32>
    %c64 = arith.constant 64 : index
    %c0_1 = arith.constant 0 : index
    %1 = vector.load %arg1[%c64, %c0_1] : memref<69x256xf32, #tpu.memory_space<vmem>>, vector<4x256xf32>
    %c68 = arith.constant 68 : index
    %c0_2 = arith.constant 0 : index
    %2 = vector.load %arg1[%c68, %c0_2] : memref<69x256xf32, #tpu.memory_space<vmem>>, vector<1x256xf32>
    %c0_3 = arith.constant 0 : index
    %c0_4 = arith.constant 0 : index
    %3 = vector.load %arg0[%c0_3, %c0_4] : memref<14x4xf32, #tpu.memory_space<vmem>>, vector<14x4xf32>
    %cst = arith.constant dense<0.000000e+00> : vector<14x256xf32>
    %4 = tpu.matmul %3, %1, %cst {dimension_numbers = #tpu.dot_dimension_numbers<[1], [0], [0], [1], [0, 0, 1, 1], [], []>} : vector<14x4xf32>, vector<4x256xf32>, vector<14x256xf32> -> vector<14x256xf32>
    %5 = vector.broadcast %2 : vector<1x256xf32> to vector<14x256xf32>
    %6 = arith.addf %4, %5 : vector<14x256xf32>
    %cst_5 = arith.constant 0.000000e+00 : f32
    %7 = vector.broadcast %cst_5 : f32 to vector<1x64xf32>
    %8 = tpu.iota {dimensions = array<i32: 1>} : vector<1x64xi32>
    %c32_i32 = arith.constant 32 : i32
    %9 = vector.broadcast %c32_i32 : i32 to vector<1x64xi32>
    %10 = arith.cmpi slt, %8, %9 : vector<1x64xi32>
    %11 = vector.extract_strided_slice %6 {offsets = [0, 0], sizes = [1, 256], strides = [1, 1]} : vector<14x256xf32> to vector<1x256xf32>
    %cst_6 = arith.constant dense<0.000000e+00> : vector<1x256xf32>
    %12 = tpu.matmul %7, %0, %cst_6 {dimension_numbers = #tpu.dot_dimension_numbers<[1], [0], [0], [1], [0, 0, 1, 1], [], []>} : vector<1x64xf32>, vector<64x256xf32>, vector<1x256xf32> -> vector<1x256xf32>
    %13 = arith.addf %11, %12 : vector<1x256xf32>
    %14 = arith.negf %13 : vector<1x256xf32>
    %15 = math.exp %14 : vector<1x256xf32>
    %cst_7 = arith.constant 1.000000e+00 : f32
    %16 = vector.broadcast %cst_7 : f32 to vector<1x256xf32>
    %17 = arith.addf %16, %15 : vector<1x256xf32>
    %18 = arith.divf %16, %17 : vector<1x256xf32>
    %19 = vector.extract_strided_slice %18 {offsets = [0, 0], sizes = [1, 64], strides = [1, 1]} : vector<1x256xf32> to vector<1x64xf32>
    %20 = vector.extract_strided_slice %18 {offsets = [0, 64], sizes = [1, 64], strides = [1, 1]} : vector<1x256xf32> to vector<1x64xf32>
    %21 = vector.extract_strided_slice %18 {offsets = [0, 128], sizes = [1, 64], strides = [1, 1]} : vector<1x256xf32> to vector<1x64xf32>
    %cst_8 = arith.constant 2.000000e+00 : f32
    %22 = vector.broadcast %cst_8 : f32 to vector<1x64xf32>
    %23 = arith.mulf %22, %21 : vector<1x64xf32>
    %cst_9 = arith.constant 1.000000e+00 : f32
    %24 = vector.broadcast %cst_9 : f32 to vector<1x64xf32>
    %25 = arith.subf %23, %24 : vector<1x64xf32>
    %26 = vector.extract_strided_slice %18 {offsets = [0, 192], sizes = [1, 64], strides = [1, 1]} : vector<1x256xf32> to vector<1x64xf32>
    %27 = arith.mulf %20, %7 : vector<1x64xf32>
    %28 = arith.mulf %19, %25 : vector<1x64xf32>
    %29 = arith.addf %27, %28 : vector<1x64xf32>
    %30 = math.tanh %29 : vector<1x64xf32>
    %31 = arith.mulf %26, %30 : vector<1x64xf32>
    %cst_10 = arith.constant 0.000000e+00 : f32
    %32 = vector.broadcast %cst_10 : f32 to vector<1x64xf32>
    %33 = arith.select %10, %31, %32 : vector<1x64xi1>, vector<1x64xf32>
    %cst_11 = arith.constant 0.000000e+00 : f32
    %34 = vector.broadcast %cst_11 : f32 to vector<1x64xf32>
    %35 = arith.select %10, %29, %34 : vector<1x64xi1>, vector<1x64xf32>
    %36 = vector.extract_strided_slice %6 {offsets = [1, 0], sizes = [1, 256], strides = [1, 1]} : vector<14x256xf32> to vector<1x256xf32>
    %cst_12 = arith.constant dense<0.000000e+00> : vector<1x256xf32>
    %37 = tpu.matmul %33, %0, %cst_12 {dimension_numbers = #tpu.dot_dimension_numbers<[1], [0], [0], [1], [0, 0, 1, 1], [], []>} : vector<1x64xf32>, vector<64x256xf32>, vector<1x256xf32> -> vector<1x256xf32>
    %38 = arith.addf %36, %37 : vector<1x256xf32>
    %39 = arith.negf %38 : vector<1x256xf32>
    %40 = math.exp %39 : vector<1x256xf32>
    %cst_13 = arith.constant 1.000000e+00 : f32
    %41 = vector.broadcast %cst_13 : f32 to vector<1x256xf32>
    %42 = arith.addf %41, %40 : vector<1x256xf32>
    %43 = arith.divf %41, %42 : vector<1x256xf32>
    %44 = vector.extract_strided_slice %43 {offsets = [0, 0], sizes = [1, 64], strides = [1, 1]} : vector<1x256xf32> to vector<1x64xf32>
    %45 = vector.extract_strided_slice %43 {offsets = [0, 64], sizes = [1, 64], strides = [1, 1]} : vector<1x256xf32> to vector<1x64xf32>
    %46 = vector.extract_strided_slice %43 {offsets = [0, 128], sizes = [1, 64], strides = [1, 1]} : vector<1x256xf32> to vector<1x64xf32>
    %cst_14 = arith.constant 2.000000e+00 : f32
    %47 = vector.broadcast %cst_14 : f32 to vector<1x64xf32>
    %48 = arith.mulf %47, %46 : vector<1x64xf32>
    %cst_15 = arith.constant 1.000000e+00 : f32
    %49 = vector.broadcast %cst_15 : f32 to vector<1x64xf32>
    %50 = arith.subf %48, %49 : vector<1x64xf32>
    %51 = vector.extract_strided_slice %43 {offsets = [0, 192], sizes = [1, 64], strides = [1, 1]} : vector<1x256xf32> to vector<1x64xf32>
    %52 = arith.mulf %45, %35 : vector<1x64xf32>
    %53 = arith.mulf %44, %50 : vector<1x64xf32>
    %54 = arith.addf %52, %53 : vector<1x64xf32>
    %55 = math.tanh %54 : vector<1x64xf32>
    %56 = arith.mulf %51, %55 : vector<1x64xf32>
    %57 = vector.extract_strided_slice %6 {offsets = [2, 0], sizes = [1, 256], strides = [1, 1]} : vector<14x256xf32> to vector<1x256xf32>
    %cst_16 = arith.constant dense<0.000000e+00> : vector<1x256xf32>
    %58 = tpu.matmul %56, %0, %cst_16 {dimension_numbers = #tpu.dot_dimension_numbers<[1], [0], [0], [1], [0, 0, 1, 1], [], []>} : vector<1x64xf32>, vector<64x256xf32>, vector<1x256xf32> -> vector<1x256xf32>
    %59 = arith.addf %57, %58 : vector<1x256xf32>
    %60 = arith.negf %59 : vector<1x256xf32>
    %61 = math.exp %60 : vector<1x256xf32>
    %cst_17 = arith.constant 1.000000e+00 : f32
    %62 = vector.broadcast %cst_17 : f32 to vector<1x256xf32>
    %63 = arith.addf %62, %61 : vector<1x256xf32>
    %64 = arith.divf %62, %63 : vector<1x256xf32>
    %65 = vector.extract_strided_slice %64 {offsets = [0, 0], sizes = [1, 64], strides = [1, 1]} : vector<1x256xf32> to vector<1x64xf32>
    %66 = vector.extract_strided_slice %64 {offsets = [0, 64], sizes = [1, 64], strides = [1, 1]} : vector<1x256xf32> to vector<1x64xf32>
    %67 = vector.extract_strided_slice %64 {offsets = [0, 128], sizes = [1, 64], strides = [1, 1]} : vector<1x256xf32> to vector<1x64xf32>
    %cst_18 = arith.constant 2.000000e+00 : f32
    %68 = vector.broadcast %cst_18 : f32 to vector<1x64xf32>
    %69 = arith.mulf %68, %67 : vector<1x64xf32>
    %cst_19 = arith.constant 1.000000e+00 : f32
    %70 = vector.broadcast %cst_19 : f32 to vector<1x64xf32>
    %71 = arith.subf %69, %70 : vector<1x64xf32>
    %72 = vector.extract_strided_slice %64 {offsets = [0, 192], sizes = [1, 64], strides = [1, 1]} : vector<1x256xf32> to vector<1x64xf32>
    %73 = arith.mulf %66, %54 : vector<1x64xf32>
    %74 = arith.mulf %65, %71 : vector<1x64xf32>
    %75 = arith.addf %73, %74 : vector<1x64xf32>
    %76 = math.tanh %75 : vector<1x64xf32>
    %77 = arith.mulf %72, %76 : vector<1x64xf32>
    %78 = vector.extract_strided_slice %6 {offsets = [3, 0], sizes = [1, 256], strides = [1, 1]} : vector<14x256xf32> to vector<1x256xf32>
    %cst_20 = arith.constant dense<0.000000e+00> : vector<1x256xf32>
    %79 = tpu.matmul %77, %0, %cst_20 {dimension_numbers = #tpu.dot_dimension_numbers<[1], [0], [0], [1], [0, 0, 1, 1], [], []>} : vector<1x64xf32>, vector<64x256xf32>, vector<1x256xf32> -> vector<1x256xf32>
    %80 = arith.addf %78, %79 : vector<1x256xf32>
    %81 = arith.negf %80 : vector<1x256xf32>
    %82 = math.exp %81 : vector<1x256xf32>
    %cst_21 = arith.constant 1.000000e+00 : f32
    %83 = vector.broadcast %cst_21 : f32 to vector<1x256xf32>
    %84 = arith.addf %83, %82 : vector<1x256xf32>
    %85 = arith.divf %83, %84 : vector<1x256xf32>
    %86 = vector.extract_strided_slice %85 {offsets = [0, 0], sizes = [1, 64], strides = [1, 1]} : vector<1x256xf32> to vector<1x64xf32>
    %87 = vector.extract_strided_slice %85 {offsets = [0, 64], sizes = [1, 64], strides = [1, 1]} : vector<1x256xf32> to vector<1x64xf32>
    %88 = vector.extract_strided_slice %85 {offsets = [0, 128], sizes = [1, 64], strides = [1, 1]} : vector<1x256xf32> to vector<1x64xf32>
    %cst_22 = arith.constant 2.000000e+00 : f32
    %89 = vector.broadcast %cst_22 : f32 to vector<1x64xf32>
    %90 = arith.mulf %89, %88 : vector<1x64xf32>
    %cst_23 = arith.constant 1.000000e+00 : f32
    %91 = vector.broadcast %cst_23 : f32 to vector<1x64xf32>
    %92 = arith.subf %90, %91 : vector<1x64xf32>
    %93 = vector.extract_strided_slice %85 {offsets = [0, 192], sizes = [1, 64], strides = [1, 1]} : vector<1x256xf32> to vector<1x64xf32>
    %94 = arith.mulf %87, %75 : vector<1x64xf32>
    %95 = arith.mulf %86, %92 : vector<1x64xf32>
    %96 = arith.addf %94, %95 : vector<1x64xf32>
    %97 = math.tanh %96 : vector<1x64xf32>
    %98 = arith.mulf %93, %97 : vector<1x64xf32>
    %99 = vector.extract_strided_slice %6 {offsets = [4, 0], sizes = [1, 256], strides = [1, 1]} : vector<14x256xf32> to vector<1x256xf32>
    %cst_24 = arith.constant dense<0.000000e+00> : vector<1x256xf32>
    %100 = tpu.matmul %98, %0, %cst_24 {dimension_numbers = #tpu.dot_dimension_numbers<[1], [0], [0], [1], [0, 0, 1, 1], [], []>} : vector<1x64xf32>, vector<64x256xf32>, vector<1x256xf32> -> vector<1x256xf32>
    %101 = arith.addf %99, %100 : vector<1x256xf32>
    %102 = arith.negf %101 : vector<1x256xf32>
    %103 = math.exp %102 : vector<1x256xf32>
    %cst_25 = arith.constant 1.000000e+00 : f32
    %104 = vector.broadcast %cst_25 : f32 to vector<1x256xf32>
    %105 = arith.addf %104, %103 : vector<1x256xf32>
    %106 = arith.divf %104, %105 : vector<1x256xf32>
    %107 = vector.extract_strided_slice %106 {offsets = [0, 0], sizes = [1, 64], strides = [1, 1]} : vector<1x256xf32> to vector<1x64xf32>
    %108 = vector.extract_strided_slice %106 {offsets = [0, 64], sizes = [1, 64], strides = [1, 1]} : vector<1x256xf32> to vector<1x64xf32>
    %109 = vector.extract_strided_slice %106 {offsets = [0, 128], sizes = [1, 64], strides = [1, 1]} : vector<1x256xf32> to vector<1x64xf32>
    %cst_26 = arith.constant 2.000000e+00 : f32
    %110 = vector.broadcast %cst_26 : f32 to vector<1x64xf32>
    %111 = arith.mulf %110, %109 : vector<1x64xf32>
    %cst_27 = arith.constant 1.000000e+00 : f32
    %112 = vector.broadcast %cst_27 : f32 to vector<1x64xf32>
    %113 = arith.subf %111, %112 : vector<1x64xf32>
    %114 = vector.extract_strided_slice %106 {offsets = [0, 192], sizes = [1, 64], strides = [1, 1]} : vector<1x256xf32> to vector<1x64xf32>
    %115 = arith.mulf %108, %96 : vector<1x64xf32>
    %116 = arith.mulf %107, %113 : vector<1x64xf32>
    %117 = arith.addf %115, %116 : vector<1x64xf32>
    %118 = math.tanh %117 : vector<1x64xf32>
    %119 = arith.mulf %114, %118 : vector<1x64xf32>
    %120 = vector.extract_strided_slice %6 {offsets = [5, 0], sizes = [1, 256], strides = [1, 1]} : vector<14x256xf32> to vector<1x256xf32>
    %cst_28 = arith.constant dense<0.000000e+00> : vector<1x256xf32>
    %121 = tpu.matmul %119, %0, %cst_28 {dimension_numbers = #tpu.dot_dimension_numbers<[1], [0], [0], [1], [0, 0, 1, 1], [], []>} : vector<1x64xf32>, vector<64x256xf32>, vector<1x256xf32> -> vector<1x256xf32>
    %122 = arith.addf %120, %121 : vector<1x256xf32>
    %123 = arith.negf %122 : vector<1x256xf32>
    %124 = math.exp %123 : vector<1x256xf32>
    %cst_29 = arith.constant 1.000000e+00 : f32
    %125 = vector.broadcast %cst_29 : f32 to vector<1x256xf32>
    %126 = arith.addf %125, %124 : vector<1x256xf32>
    %127 = arith.divf %125, %126 : vector<1x256xf32>
    %128 = vector.extract_strided_slice %127 {offsets = [0, 0], sizes = [1, 64], strides = [1, 1]} : vector<1x256xf32> to vector<1x64xf32>
    %129 = vector.extract_strided_slice %127 {offsets = [0, 64], sizes = [1, 64], strides = [1, 1]} : vector<1x256xf32> to vector<1x64xf32>
    %130 = vector.extract_strided_slice %127 {offsets = [0, 128], sizes = [1, 64], strides = [1, 1]} : vector<1x256xf32> to vector<1x64xf32>
    %cst_30 = arith.constant 2.000000e+00 : f32
    %131 = vector.broadcast %cst_30 : f32 to vector<1x64xf32>
    %132 = arith.mulf %131, %130 : vector<1x64xf32>
    %cst_31 = arith.constant 1.000000e+00 : f32
    %133 = vector.broadcast %cst_31 : f32 to vector<1x64xf32>
    %134 = arith.subf %132, %133 : vector<1x64xf32>
    %135 = vector.extract_strided_slice %127 {offsets = [0, 192], sizes = [1, 64], strides = [1, 1]} : vector<1x256xf32> to vector<1x64xf32>
    %136 = arith.mulf %129, %117 : vector<1x64xf32>
    %137 = arith.mulf %128, %134 : vector<1x64xf32>
    %138 = arith.addf %136, %137 : vector<1x64xf32>
    %139 = math.tanh %138 : vector<1x64xf32>
    %140 = arith.mulf %135, %139 : vector<1x64xf32>
    %141 = vector.extract_strided_slice %6 {offsets = [6, 0], sizes = [1, 256], strides = [1, 1]} : vector<14x256xf32> to vector<1x256xf32>
    %cst_32 = arith.constant dense<0.000000e+00> : vector<1x256xf32>
    %142 = tpu.matmul %140, %0, %cst_32 {dimension_numbers = #tpu.dot_dimension_numbers<[1], [0], [0], [1], [0, 0, 1, 1], [], []>} : vector<1x64xf32>, vector<64x256xf32>, vector<1x256xf32> -> vector<1x256xf32>
    %143 = arith.addf %141, %142 : vector<1x256xf32>
    %144 = arith.negf %143 : vector<1x256xf32>
    %145 = math.exp %144 : vector<1x256xf32>
    %cst_33 = arith.constant 1.000000e+00 : f32
    %146 = vector.broadcast %cst_33 : f32 to vector<1x256xf32>
    %147 = arith.addf %146, %145 : vector<1x256xf32>
    %148 = arith.divf %146, %147 : vector<1x256xf32>
    %149 = vector.extract_strided_slice %148 {offsets = [0, 0], sizes = [1, 64], strides = [1, 1]} : vector<1x256xf32> to vector<1x64xf32>
    %150 = vector.extract_strided_slice %148 {offsets = [0, 64], sizes = [1, 64], strides = [1, 1]} : vector<1x256xf32> to vector<1x64xf32>
    %151 = vector.extract_strided_slice %148 {offsets = [0, 128], sizes = [1, 64], strides = [1, 1]} : vector<1x256xf32> to vector<1x64xf32>
    %cst_34 = arith.constant 2.000000e+00 : f32
    %152 = vector.broadcast %cst_34 : f32 to vector<1x64xf32>
    %153 = arith.mulf %152, %151 : vector<1x64xf32>
    %cst_35 = arith.constant 1.000000e+00 : f32
    %154 = vector.broadcast %cst_35 : f32 to vector<1x64xf32>
    %155 = arith.subf %153, %154 : vector<1x64xf32>
    %156 = vector.extract_strided_slice %148 {offsets = [0, 192], sizes = [1, 64], strides = [1, 1]} : vector<1x256xf32> to vector<1x64xf32>
    %157 = arith.mulf %150, %138 : vector<1x64xf32>
    %158 = arith.mulf %149, %155 : vector<1x64xf32>
    %159 = arith.addf %157, %158 : vector<1x64xf32>
    %160 = math.tanh %159 : vector<1x64xf32>
    %161 = arith.mulf %156, %160 : vector<1x64xf32>
    %162 = vector.extract_strided_slice %6 {offsets = [7, 0], sizes = [1, 256], strides = [1, 1]} : vector<14x256xf32> to vector<1x256xf32>
    %cst_36 = arith.constant dense<0.000000e+00> : vector<1x256xf32>
    %163 = tpu.matmul %161, %0, %cst_36 {dimension_numbers = #tpu.dot_dimension_numbers<[1], [0], [0], [1], [0, 0, 1, 1], [], []>} : vector<1x64xf32>, vector<64x256xf32>, vector<1x256xf32> -> vector<1x256xf32>
    %164 = arith.addf %162, %163 : vector<1x256xf32>
    %165 = arith.negf %164 : vector<1x256xf32>
    %166 = math.exp %165 : vector<1x256xf32>
    %cst_37 = arith.constant 1.000000e+00 : f32
    %167 = vector.broadcast %cst_37 : f32 to vector<1x256xf32>
    %168 = arith.addf %167, %166 : vector<1x256xf32>
    %169 = arith.divf %167, %168 : vector<1x256xf32>
    %170 = vector.extract_strided_slice %169 {offsets = [0, 0], sizes = [1, 64], strides = [1, 1]} : vector<1x256xf32> to vector<1x64xf32>
    %171 = vector.extract_strided_slice %169 {offsets = [0, 64], sizes = [1, 64], strides = [1, 1]} : vector<1x256xf32> to vector<1x64xf32>
    %172 = vector.extract_strided_slice %169 {offsets = [0, 128], sizes = [1, 64], strides = [1, 1]} : vector<1x256xf32> to vector<1x64xf32>
    %cst_38 = arith.constant 2.000000e+00 : f32
    %173 = vector.broadcast %cst_38 : f32 to vector<1x64xf32>
    %174 = arith.mulf %173, %172 : vector<1x64xf32>
    %cst_39 = arith.constant 1.000000e+00 : f32
    %175 = vector.broadcast %cst_39 : f32 to vector<1x64xf32>
    %176 = arith.subf %174, %175 : vector<1x64xf32>
    %177 = vector.extract_strided_slice %169 {offsets = [0, 192], sizes = [1, 64], strides = [1, 1]} : vector<1x256xf32> to vector<1x64xf32>
    %178 = arith.mulf %171, %159 : vector<1x64xf32>
    %179 = arith.mulf %170, %176 : vector<1x64xf32>
    %180 = arith.addf %178, %179 : vector<1x64xf32>
    %181 = math.tanh %180 : vector<1x64xf32>
    %182 = arith.mulf %177, %181 : vector<1x64xf32>
    %183 = vector.extract_strided_slice %6 {offsets = [8, 0], sizes = [1, 256], strides = [1, 1]} : vector<14x256xf32> to vector<1x256xf32>
    %cst_40 = arith.constant dense<0.000000e+00> : vector<1x256xf32>
    %184 = tpu.matmul %182, %0, %cst_40 {dimension_numbers = #tpu.dot_dimension_numbers<[1], [0], [0], [1], [0, 0, 1, 1], [], []>} : vector<1x64xf32>, vector<64x256xf32>, vector<1x256xf32> -> vector<1x256xf32>
    %185 = arith.addf %183, %184 : vector<1x256xf32>
    %186 = arith.negf %185 : vector<1x256xf32>
    %187 = math.exp %186 : vector<1x256xf32>
    %cst_41 = arith.constant 1.000000e+00 : f32
    %188 = vector.broadcast %cst_41 : f32 to vector<1x256xf32>
    %189 = arith.addf %188, %187 : vector<1x256xf32>
    %190 = arith.divf %188, %189 : vector<1x256xf32>
    %191 = vector.extract_strided_slice %190 {offsets = [0, 0], sizes = [1, 64], strides = [1, 1]} : vector<1x256xf32> to vector<1x64xf32>
    %192 = vector.extract_strided_slice %190 {offsets = [0, 64], sizes = [1, 64], strides = [1, 1]} : vector<1x256xf32> to vector<1x64xf32>
    %193 = vector.extract_strided_slice %190 {offsets = [0, 128], sizes = [1, 64], strides = [1, 1]} : vector<1x256xf32> to vector<1x64xf32>
    %cst_42 = arith.constant 2.000000e+00 : f32
    %194 = vector.broadcast %cst_42 : f32 to vector<1x64xf32>
    %195 = arith.mulf %194, %193 : vector<1x64xf32>
    %cst_43 = arith.constant 1.000000e+00 : f32
    %196 = vector.broadcast %cst_43 : f32 to vector<1x64xf32>
    %197 = arith.subf %195, %196 : vector<1x64xf32>
    %198 = vector.extract_strided_slice %190 {offsets = [0, 192], sizes = [1, 64], strides = [1, 1]} : vector<1x256xf32> to vector<1x64xf32>
    %199 = arith.mulf %192, %180 : vector<1x64xf32>
    %200 = arith.mulf %191, %197 : vector<1x64xf32>
    %201 = arith.addf %199, %200 : vector<1x64xf32>
    %202 = math.tanh %201 : vector<1x64xf32>
    %203 = arith.mulf %198, %202 : vector<1x64xf32>
    %204 = vector.extract_strided_slice %6 {offsets = [9, 0], sizes = [1, 256], strides = [1, 1]} : vector<14x256xf32> to vector<1x256xf32>
    %cst_44 = arith.constant dense<0.000000e+00> : vector<1x256xf32>
    %205 = tpu.matmul %203, %0, %cst_44 {dimension_numbers = #tpu.dot_dimension_numbers<[1], [0], [0], [1], [0, 0, 1, 1], [], []>} : vector<1x64xf32>, vector<64x256xf32>, vector<1x256xf32> -> vector<1x256xf32>
    %206 = arith.addf %204, %205 : vector<1x256xf32>
    %207 = arith.negf %206 : vector<1x256xf32>
    %208 = math.exp %207 : vector<1x256xf32>
    %cst_45 = arith.constant 1.000000e+00 : f32
    %209 = vector.broadcast %cst_45 : f32 to vector<1x256xf32>
    %210 = arith.addf %209, %208 : vector<1x256xf32>
    %211 = arith.divf %209, %210 : vector<1x256xf32>
    %212 = vector.extract_strided_slice %211 {offsets = [0, 0], sizes = [1, 64], strides = [1, 1]} : vector<1x256xf32> to vector<1x64xf32>
    %213 = vector.extract_strided_slice %211 {offsets = [0, 64], sizes = [1, 64], strides = [1, 1]} : vector<1x256xf32> to vector<1x64xf32>
    %214 = vector.extract_strided_slice %211 {offsets = [0, 128], sizes = [1, 64], strides = [1, 1]} : vector<1x256xf32> to vector<1x64xf32>
    %cst_46 = arith.constant 2.000000e+00 : f32
    %215 = vector.broadcast %cst_46 : f32 to vector<1x64xf32>
    %216 = arith.mulf %215, %214 : vector<1x64xf32>
    %cst_47 = arith.constant 1.000000e+00 : f32
    %217 = vector.broadcast %cst_47 : f32 to vector<1x64xf32>
    %218 = arith.subf %216, %217 : vector<1x64xf32>
    %219 = vector.extract_strided_slice %211 {offsets = [0, 192], sizes = [1, 64], strides = [1, 1]} : vector<1x256xf32> to vector<1x64xf32>
    %220 = arith.mulf %213, %201 : vector<1x64xf32>
    %221 = arith.mulf %212, %218 : vector<1x64xf32>
    %222 = arith.addf %220, %221 : vector<1x64xf32>
    %223 = math.tanh %222 : vector<1x64xf32>
    %224 = arith.mulf %219, %223 : vector<1x64xf32>
    %225 = vector.extract_strided_slice %6 {offsets = [10, 0], sizes = [1, 256], strides = [1, 1]} : vector<14x256xf32> to vector<1x256xf32>
    %cst_48 = arith.constant dense<0.000000e+00> : vector<1x256xf32>
    %226 = tpu.matmul %224, %0, %cst_48 {dimension_numbers = #tpu.dot_dimension_numbers<[1], [0], [0], [1], [0, 0, 1, 1], [], []>} : vector<1x64xf32>, vector<64x256xf32>, vector<1x256xf32> -> vector<1x256xf32>
    %227 = arith.addf %225, %226 : vector<1x256xf32>
    %228 = arith.negf %227 : vector<1x256xf32>
    %229 = math.exp %228 : vector<1x256xf32>
    %cst_49 = arith.constant 1.000000e+00 : f32
    %230 = vector.broadcast %cst_49 : f32 to vector<1x256xf32>
    %231 = arith.addf %230, %229 : vector<1x256xf32>
    %232 = arith.divf %230, %231 : vector<1x256xf32>
    %233 = vector.extract_strided_slice %232 {offsets = [0, 0], sizes = [1, 64], strides = [1, 1]} : vector<1x256xf32> to vector<1x64xf32>
    %234 = vector.extract_strided_slice %232 {offsets = [0, 64], sizes = [1, 64], strides = [1, 1]} : vector<1x256xf32> to vector<1x64xf32>
    %235 = vector.extract_strided_slice %232 {offsets = [0, 128], sizes = [1, 64], strides = [1, 1]} : vector<1x256xf32> to vector<1x64xf32>
    %cst_50 = arith.constant 2.000000e+00 : f32
    %236 = vector.broadcast %cst_50 : f32 to vector<1x64xf32>
    %237 = arith.mulf %236, %235 : vector<1x64xf32>
    %cst_51 = arith.constant 1.000000e+00 : f32
    %238 = vector.broadcast %cst_51 : f32 to vector<1x64xf32>
    %239 = arith.subf %237, %238 : vector<1x64xf32>
    %240 = vector.extract_strided_slice %232 {offsets = [0, 192], sizes = [1, 64], strides = [1, 1]} : vector<1x256xf32> to vector<1x64xf32>
    %241 = arith.mulf %234, %222 : vector<1x64xf32>
    %242 = arith.mulf %233, %239 : vector<1x64xf32>
    %243 = arith.addf %241, %242 : vector<1x64xf32>
    %244 = math.tanh %243 : vector<1x64xf32>
    %245 = arith.mulf %240, %244 : vector<1x64xf32>
    %246 = vector.extract_strided_slice %6 {offsets = [11, 0], sizes = [1, 256], strides = [1, 1]} : vector<14x256xf32> to vector<1x256xf32>
    %cst_52 = arith.constant dense<0.000000e+00> : vector<1x256xf32>
    %247 = tpu.matmul %245, %0, %cst_52 {dimension_numbers = #tpu.dot_dimension_numbers<[1], [0], [0], [1], [0, 0, 1, 1], [], []>} : vector<1x64xf32>, vector<64x256xf32>, vector<1x256xf32> -> vector<1x256xf32>
    %248 = arith.addf %246, %247 : vector<1x256xf32>
    %249 = arith.negf %248 : vector<1x256xf32>
    %250 = math.exp %249 : vector<1x256xf32>
    %cst_53 = arith.constant 1.000000e+00 : f32
    %251 = vector.broadcast %cst_53 : f32 to vector<1x256xf32>
    %252 = arith.addf %251, %250 : vector<1x256xf32>
    %253 = arith.divf %251, %252 : vector<1x256xf32>
    %254 = vector.extract_strided_slice %253 {offsets = [0, 0], sizes = [1, 64], strides = [1, 1]} : vector<1x256xf32> to vector<1x64xf32>
    %255 = vector.extract_strided_slice %253 {offsets = [0, 64], sizes = [1, 64], strides = [1, 1]} : vector<1x256xf32> to vector<1x64xf32>
    %256 = vector.extract_strided_slice %253 {offsets = [0, 128], sizes = [1, 64], strides = [1, 1]} : vector<1x256xf32> to vector<1x64xf32>
    %cst_54 = arith.constant 2.000000e+00 : f32
    %257 = vector.broadcast %cst_54 : f32 to vector<1x64xf32>
    %258 = arith.mulf %257, %256 : vector<1x64xf32>
    %cst_55 = arith.constant 1.000000e+00 : f32
    %259 = vector.broadcast %cst_55 : f32 to vector<1x64xf32>
    %260 = arith.subf %258, %259 : vector<1x64xf32>
    %261 = vector.extract_strided_slice %253 {offsets = [0, 192], sizes = [1, 64], strides = [1, 1]} : vector<1x256xf32> to vector<1x64xf32>
    %262 = arith.mulf %255, %243 : vector<1x64xf32>
    %263 = arith.mulf %254, %260 : vector<1x64xf32>
    %264 = arith.addf %262, %263 : vector<1x64xf32>
    %265 = math.tanh %264 : vector<1x64xf32>
    %266 = arith.mulf %261, %265 : vector<1x64xf32>
    %267 = vector.extract_strided_slice %6 {offsets = [12, 0], sizes = [1, 256], strides = [1, 1]} : vector<14x256xf32> to vector<1x256xf32>
    %cst_56 = arith.constant dense<0.000000e+00> : vector<1x256xf32>
    %268 = tpu.matmul %266, %0, %cst_56 {dimension_numbers = #tpu.dot_dimension_numbers<[1], [0], [0], [1], [0, 0, 1, 1], [], []>} : vector<1x64xf32>, vector<64x256xf32>, vector<1x256xf32> -> vector<1x256xf32>
    %269 = arith.addf %267, %268 : vector<1x256xf32>
    %270 = arith.negf %269 : vector<1x256xf32>
    %271 = math.exp %270 : vector<1x256xf32>
    %cst_57 = arith.constant 1.000000e+00 : f32
    %272 = vector.broadcast %cst_57 : f32 to vector<1x256xf32>
    %273 = arith.addf %272, %271 : vector<1x256xf32>
    %274 = arith.divf %272, %273 : vector<1x256xf32>
    %275 = vector.extract_strided_slice %274 {offsets = [0, 0], sizes = [1, 64], strides = [1, 1]} : vector<1x256xf32> to vector<1x64xf32>
    %276 = vector.extract_strided_slice %274 {offsets = [0, 64], sizes = [1, 64], strides = [1, 1]} : vector<1x256xf32> to vector<1x64xf32>
    %277 = vector.extract_strided_slice %274 {offsets = [0, 128], sizes = [1, 64], strides = [1, 1]} : vector<1x256xf32> to vector<1x64xf32>
    %cst_58 = arith.constant 2.000000e+00 : f32
    %278 = vector.broadcast %cst_58 : f32 to vector<1x64xf32>
    %279 = arith.mulf %278, %277 : vector<1x64xf32>
    %cst_59 = arith.constant 1.000000e+00 : f32
    %280 = vector.broadcast %cst_59 : f32 to vector<1x64xf32>
    %281 = arith.subf %279, %280 : vector<1x64xf32>
    %282 = vector.extract_strided_slice %274 {offsets = [0, 192], sizes = [1, 64], strides = [1, 1]} : vector<1x256xf32> to vector<1x64xf32>
    %283 = arith.mulf %276, %264 : vector<1x64xf32>
    %284 = arith.mulf %275, %281 : vector<1x64xf32>
    %285 = arith.addf %283, %284 : vector<1x64xf32>
    %286 = math.tanh %285 : vector<1x64xf32>
    %287 = arith.mulf %282, %286 : vector<1x64xf32>
    %288 = vector.extract_strided_slice %6 {offsets = [13, 0], sizes = [1, 256], strides = [1, 1]} : vector<14x256xf32> to vector<1x256xf32>
    %cst_60 = arith.constant dense<0.000000e+00> : vector<1x256xf32>
    %289 = tpu.matmul %287, %0, %cst_60 {dimension_numbers = #tpu.dot_dimension_numbers<[1], [0], [0], [1], [0, 0, 1, 1], [], []>} : vector<1x64xf32>, vector<64x256xf32>, vector<1x256xf32> -> vector<1x256xf32>
    %290 = arith.addf %288, %289 : vector<1x256xf32>
    %291 = arith.negf %290 : vector<1x256xf32>
    %292 = math.exp %291 : vector<1x256xf32>
    %cst_61 = arith.constant 1.000000e+00 : f32
    %293 = vector.broadcast %cst_61 : f32 to vector<1x256xf32>
    %294 = arith.addf %293, %292 : vector<1x256xf32>
    %295 = arith.divf %293, %294 : vector<1x256xf32>
    %296 = vector.extract_strided_slice %295 {offsets = [0, 0], sizes = [1, 64], strides = [1, 1]} : vector<1x256xf32> to vector<1x64xf32>
    %297 = vector.extract_strided_slice %295 {offsets = [0, 64], sizes = [1, 64], strides = [1, 1]} : vector<1x256xf32> to vector<1x64xf32>
    %298 = vector.extract_strided_slice %295 {offsets = [0, 128], sizes = [1, 64], strides = [1, 1]} : vector<1x256xf32> to vector<1x64xf32>
    %cst_62 = arith.constant 2.000000e+00 : f32
    %299 = vector.broadcast %cst_62 : f32 to vector<1x64xf32>
    %300 = arith.mulf %299, %298 : vector<1x64xf32>
    %cst_63 = arith.constant 1.000000e+00 : f32
    %301 = vector.broadcast %cst_63 : f32 to vector<1x64xf32>
    %302 = arith.subf %300, %301 : vector<1x64xf32>
    %303 = vector.extract_strided_slice %295 {offsets = [0, 192], sizes = [1, 64], strides = [1, 1]} : vector<1x256xf32> to vector<1x64xf32>
    %304 = arith.mulf %297, %285 : vector<1x64xf32>
    %305 = arith.mulf %296, %302 : vector<1x64xf32>
    %306 = arith.addf %304, %305 : vector<1x64xf32>
    %307 = math.tanh %306 : vector<1x64xf32>
    %308 = arith.mulf %303, %307 : vector<1x64xf32>
    %309 = vector.extract_strided_slice %308 {offsets = [0, 0], sizes = [1, 32], strides = [1, 1]} : vector<1x64xf32> to vector<1x32xf32>
    %310 = vector.extract_strided_slice %306 {offsets = [0, 0], sizes = [1, 32], strides = [1, 1]} : vector<1x64xf32> to vector<1x32xf32>
    %cst_64 = arith.constant dense<0.000000e+00> : vector<1x256xf32>
    %311 = tpu.matmul %308, %0, %cst_64 {dimension_numbers = #tpu.dot_dimension_numbers<[1], [0], [0], [1], [0, 0, 1, 1], [], []>} : vector<1x64xf32>, vector<64x256xf32>, vector<1x256xf32> -> vector<1x256xf32>
    %312 = arith.addf %2, %311 : vector<1x256xf32>
    %313 = arith.negf %312 : vector<1x256xf32>
    %314 = math.exp %313 : vector<1x256xf32>
    %cst_65 = arith.constant 1.000000e+00 : f32
    %315 = vector.broadcast %cst_65 : f32 to vector<1x256xf32>
    %316 = arith.addf %315, %314 : vector<1x256xf32>
    %317 = arith.divf %315, %316 : vector<1x256xf32>
    %318 = vector.extract_strided_slice %317 {offsets = [0, 0], sizes = [1, 64], strides = [1, 1]} : vector<1x256xf32> to vector<1x64xf32>
    %319 = vector.extract_strided_slice %317 {offsets = [0, 64], sizes = [1, 64], strides = [1, 1]} : vector<1x256xf32> to vector<1x64xf32>
    %320 = vector.extract_strided_slice %317 {offsets = [0, 128], sizes = [1, 64], strides = [1, 1]} : vector<1x256xf32> to vector<1x64xf32>
    %cst_66 = arith.constant 2.000000e+00 : f32
    %321 = vector.broadcast %cst_66 : f32 to vector<1x64xf32>
    %322 = arith.mulf %321, %320 : vector<1x64xf32>
    %cst_67 = arith.constant 1.000000e+00 : f32
    %323 = vector.broadcast %cst_67 : f32 to vector<1x64xf32>
    %324 = arith.subf %322, %323 : vector<1x64xf32>
    %325 = vector.extract_strided_slice %317 {offsets = [0, 192], sizes = [1, 64], strides = [1, 1]} : vector<1x256xf32> to vector<1x64xf32>
    %326 = arith.mulf %319, %306 : vector<1x64xf32>
    %327 = arith.mulf %318, %324 : vector<1x64xf32>
    %328 = arith.addf %326, %327 : vector<1x64xf32>
    %329 = math.tanh %328 : vector<1x64xf32>
    %330 = arith.mulf %325, %329 : vector<1x64xf32>
    %331 = vector.extract_strided_slice %330 {offsets = [0, 32], sizes = [1, 32], strides = [1, 1]} : vector<1x64xf32> to vector<1x32xf32>
    %332 = vector.extract_strided_slice %328 {offsets = [0, 32], sizes = [1, 32], strides = [1, 1]} : vector<1x64xf32> to vector<1x32xf32>
    %c0_68 = arith.constant 0 : index
    %c0_69 = arith.constant 0 : index
    %333 = vector.load %arg2[%c0_68, %c0_69] : memref<4x32xf32, #tpu.memory_space<vmem>>, vector<1x32xf32>
    tpu.vector_store %arg2[%c0_68, %c0_69], %309 {strides = array<i32>} : memref<4x32xf32, #tpu.memory_space<vmem>>, vector<1x32xf32>,
    %c1 = arith.constant 1 : index
    %c0_70 = arith.constant 0 : index
    %334 = vector.load %arg2[%c1, %c0_70] : memref<4x32xf32, #tpu.memory_space<vmem>>, vector<1x32xf32>
    tpu.vector_store %arg2[%c1, %c0_70], %331 {strides = array<i32>} : memref<4x32xf32, #tpu.memory_space<vmem>>, vector<1x32xf32>,
    %c2 = arith.constant 2 : index
    %c0_71 = arith.constant 0 : index
    %335 = vector.load %arg2[%c2, %c0_71] : memref<4x32xf32, #tpu.memory_space<vmem>>, vector<1x32xf32>
    tpu.vector_store %arg2[%c2, %c0_71], %310 {strides = array<i32>} : memref<4x32xf32, #tpu.memory_space<vmem>>, vector<1x32xf32>,
    %c3 = arith.constant 3 : index
    %c0_72 = arith.constant 0 : index
    %336 = vector.load %arg2[%c3, %c0_72] : memref<4x32xf32, #tpu.memory_space<vmem>>, vector<1x32xf32>
    tpu.vector_store %arg2[%c3, %c0_72], %332 {strides = array<i32>} : memref<4x32xf32, #tpu.memory_space<vmem>>, vector<1x32xf32>,
    return
  }
}

</mosaic_0001>

<llo_original>
// kernel: encoder_forward.1
$region0: #{encoder_forward.1}
  #allocation0 [shape = 'u32[]', space=smem, size = 0x4, offset = 0x4, fixed_abs, tag = 'smem constant byte address 0x4 - core index']
  #allocation1 [shape = 'u32[72,128]{1,0:T(1,128)}', space=vmem, size = 0x9000, scoped, tag = 'internal scratch']
  %s0 = inlined_call_operand.vmem [shape: f32[14,4], index: 0, kind: input, shape index: {}]
  %s1 = inlined_call_operand.hbm [shape: f32[69,256], index: 1, kind: input, shape index: {}]
  %s2 = inlined_call_operand.vmem [shape: f32[4,32], index: 2, kind: output, shape index: {}]
  %s3 = sld [smem:[#allocation0]]
  $region22: #{encoder_forward.1} parent=0
    _
  %s5 = ssub.s32 1, %s3
  %s6 = scalar_select 0, %s5, %s3
  $region1: #{encoder_forward.1} parent=0
    #allocation2 [shape = 'u8[73728]{0}', space=vmem, size = 0x12000, scoped, tag = 'input window, operand 1, single buffered']
    #allocation3 [shape = 's32[1]{0}', space=sflag, size = 0x4, scoped, tag = 'scoped memory for encoder_forward.1']
    %7 = vsyncpa [#allocation3], 0
    // Predicated region
    $region2: #{encoder_forward.1} parent=1 // pred_check
      _
    $region3: #{encoder_forward.1} parent=1 // pred_check_branch
      %9 = sbr.rel (0) target = $region5
    $region4: #{encoder_forward.1} parent=1 // pred_region
      _
    $region5: #{encoder_forward.1} parent=1 // pred_fallthru
      _
    // Predicated region
    $region6: #{encoder_forward.1} parent=1 // pred_check
      _
    $region7: #{encoder_forward.1} parent=1 // pred_check_branch
      %11 = sbr.rel (0) target = $region9
    $region8: #{encoder_forward.1} parent=1 // pred_region
      %13 = vsyncadd [#allocation3], 0
      %s14 = sshll.u32 %s1, 4
      %s15 = int_to_ptr.hbm [resolvable:$true] %s14
      %s16 = sshll.u32 [#allocation2], 4
      %s17 = int_to_ptr.vmem [resolvable:$true] %s16
      %22 = dma.hbm_to_vmem [thread:$0]  %s15, 2304, %s17, [#allocation3], 256, 256, 16
    $region9: #{encoder_forward.1} parent=1 // pred_fallthru
      _
    // Predicated region
    $region10: #{encoder_forward.1} parent=1 // pred_check
      _
    $region11: #{encoder_forward.1} parent=1 // pred_check_branch
      %24 = sbr.rel (0) target = $region13
    $region12: #{encoder_forward.1} parent=1 // pred_region
      %26 = dma.done [#allocation3], 2304
    $region13: #{encoder_forward.1} parent=1 // pred_fallthru
      _
    %v27 = vld [vmem:[#allocation2] sm:$0xff]
    %v28 = vld [vmem:[#allocation2 + $0x8] sm:$0xff]
    %v29 = vld [vmem:[#allocation2 + $0x10] sm:$0xff]
    %v30 = vld [vmem:[#allocation2 + $0x18] sm:$0xff]
    %v31 = vld [vmem:[#allocation2 + $0x20] sm:$0xff]
    %v32 = vld [vmem:[#allocation2 + $0x28] sm:$0xff]
    %v33 = vld [vmem:[#allocation2 + $0x30] sm:$0xff]
    %v34 = vld [vmem:[#allocation2 + $0x38] sm:$0xff]
    %v35 = vld [vmem:[#allocation2 + $0x40] sm:$0xff]
    %v36 = vld [vmem:[#allocation2 + $0x48] sm:$0xff]
    %v37 = vld [vmem:[#allocation2 + $0x50] sm:$0xff]
    %v38 = vld [vmem:[#allocation2 + $0x58] sm:$0xff]
    %v39 = vld [vmem:[#allocation2 + $0x60] sm:$0xff]
    %v40 = vld [vmem:[#allocation2 + $0x68] sm:$0xff]
    %v41 = vld [vmem:[#allocation2 + $0x70] sm:$0xff]
    %v42 = vld [vmem:[#allocation2 + $0x78] sm:$0xff]
    %v43 = vld [vmem:[#allocation2 + $0x80] sm:$0xf]
    %v44 = vld [vmem:[#allocation2 + $0x88] sm:$0xf]
    %s45 = scalar_lea.vmem [#allocation2], 132
    %v46 = vld [vmem:[%s45] ss:$8 sm:$0x3]
    %v47 = vld [vmem:[%s0] sm:$0xff]
    %v48 = vld [vmem:[%s0 + $0x8] sm:$0x3f]
    %v50 = vperm.slane %v46, 0
    %v51 = vperm.slane %v46, 1
    %vm54 = vcmask 31744
    %v56 = vsel %vm54, %v47, 0
    %v59 = vsel %vm54, %v48, 0
    %vm61 = vcmask 1043456
    %v63 = vsel %vm61, %v43, 0
    %v66 = vsel %vm61, %v44, 0
    %68 = vmatpush.msra.mxu0 0.0
    %69 = vmatpush.msra.mxu0 0.0
    %70 = vmatpush.msra.mxu0 0.0
    %71 = vmatpush.msra.mxu0 0.0
    %72 = vmatpush.msra.mxu0 0.0
    %73 = vmatpush.msra.mxu0 0.0
    %74 = vmatpush.msra.mxu0 0.0
    %75 = vmatpush.msra.mxu0 0.0
    %76 = vmatpush.msra.mxu0 0.0
    %77 = vmatpush.msra.mxu0 0.0
    %78 = vmatpush.msra.mxu0 0.0
    %79 = vmatpush.msra.mxu0 0.0
    %80 = vmatpush.msra.mxu0 0.0
    %81 = vmatpush.msra.mxu0 0.0
    %82 = vmatpush.msra.mxu0 0.0
    %83 = vmatpush.msra.mxu0 %v63
    %84 = vmatmul.f32.gmra.mxu0 %v56
    %v85 = vpop.f32.mrf.mxu0
    %v86 = vadd.f32 %v50, %v85
    %87 = vmatmul.f32.gmra.mxu0 %v59
    %v88 = vpop.f32.mrf.mxu0
    %v89 = vadd.f32 %v50, %v88
    %90 = vdwg.mxu0
    %91 = vmatpush.msra.mxu0 0.0
    %92 = vmatpush.msra.mxu0 0.0
    %93 = vmatpush.msra.mxu0 0.0
    %94 = vmatpush.msra.mxu0 0.0
    %95 = vmatpush.msra.mxu0 0.0
    %96 = vmatpush.msra.mxu0 0.0
    %97 = vmatpush.msra.mxu0 0.0
    %98 = vmatpush.msra.mxu0 0.0
    %99 = vmatpush.msra.mxu0 0.0
    %100 = vmatpush.msra.mxu0 0.0
    %101 = vmatpush.msra.mxu0 0.0
    %102 = vmatpush.msra.mxu0 0.0
    %103 = vmatpush.msra.mxu0 0.0
    %104 = vmatpush.msra.mxu0 0.0
    %105 = vmatpush.msra.mxu0 0.0
    %106 = vmatpush.msra.mxu0 %v66
    %107 = vmatmul.f32.gmra.mxu0 %v56
    %v108 = vpop.f32.mrf.mxu0
    %v109 = vadd.f32 %v51, %v108
    %110 = vmatmul.f32.gmra.mxu0 %v59
    %v111 = vpop.f32.mrf.mxu0
    %v112 = vadd.f32 %v51, %v111
    %113 = vdwg.mxu0
    %v114 = vlaneseq
    %v115 = vand.u32 %v114, 127
    %vm116 = vcmp.lt.s32.totalorder %v115, 32
    %vm117 = vcmask 523264
    %v119 = vsel %vm117, 0.0, 0
    %121 = vmatpush.msra.mxu0 0.0
    %122 = vmatpush.msra.mxu0 0.0
    %123 = vmatpush.msra.mxu0 0.0
    %124 = vmatpush.msra.mxu0 0.0
    %125 = vmatpush.msra.mxu0 0.0
    %126 = vmatpush.msra.mxu0 0.0
    %127 = vmatpush.msra.mxu0 0.0
    %128 = vmatpush.msra.mxu0 0.0
    %129 = vmatpush.msra.mxu0 %v41
    %130 = vmatpush.msra.mxu0 %v39
    %131 = vmatpush.msra.mxu0 %v37
    %132 = vmatpush.msra.mxu0 %v35
    %133 = vmatpush.msra.mxu0 %v33
    %134 = vmatpush.msra.mxu0 %v31
    %135 = vmatpush.msra.mxu0 %v29
    %136 = vmatpush.msra.mxu0 %v27
    %137 = vmatmul.f32.gmra.mxu0 %v119
    %v138 = vpop.f32.mrf.mxu0
    %v139 = vadd.f32 0.0, %v138
    %140 = vdwg.mxu0
    %141 = vmatpush.msra.mxu0 0.0
    %142 = vmatpush.msra.mxu0 0.0
    %143 = vmatpush.msra.mxu0 0.0
    %144 = vmatpush.msra.mxu0 0.0
    %145 = vmatpush.msra.mxu0 0.0
    %146 = vmatpush.msra.mxu0 0.0
    %147 = vmatpush.msra.mxu0 0.0
    %148 = vmatpush.msra.mxu0 0.0
    %149 = vmatpush.msra.mxu0 %v42
    %150 = vmatpush.msra.mxu0 %v40
    %151 = vmatpush.msra.mxu0 %v38
    %152 = vmatpush.msra.mxu0 %v36
    %153 = vmatpush.msra.mxu0 %v34
    %154 = vmatpush.msra.mxu0 %v32
    %155 = vmatpush.msra.mxu0 %v30
    %156 = vmatpush.msra.mxu0 %v28
    %157 = vmatmul.f32.gmra.mxu0 %v119
    %v158 = vpop.f32.mrf.mxu0
    %v159 = vadd.f32 0.0, %v158
    %160 = vdwg.mxu0
    %v161 = vadd.f32 %v86, %v139
    %v162 = vadd.f32 %v109, %v159
    %v163 = vxor.u32 %v161, 2147483648
    %v164 = vxor.u32 %v162, 2147483648
    %v165 = vmul.f32 %v163, 1.442695
    %v166 = vpow.pop %v165
    %v167 = vmul.f32 %v164, 1.442695
    %v168 = vpow.pop %v167
    %v169 = vadd.f32 %v166, 1.0
    %v170 = vadd.f32 %v168, 1.0
    %v171 = vrcp.pop %v169
    %v172 = vmul.f32 %v169, %v171
    %v173 = vsub.f32 1.0, %v172
    %v174 = vmul.f32 %v171, %v173
    %v175 = vadd.f32 %v171, %v174
    %vm176 = vweird.f32 %v169
    %vm177 = vweird.f32 %v171
    %vm178 = vmor %vm176, %vm177
    %v179 = vsel %vm178, %v171, %v175
    %v180 = vand.u32 2147483647, %v169
    %vm181 = vcmp.eq.f32.partialorder %v180, 8.507059e+37
    %v182 = vand.u32 %v169, 2147483648
    %v183 = vor.u32 1.1754944e-38, %v182
    %v184 = vsel %vm181, %v183, %v179
    %v185 = vmul.f32 1.0, %v184
    %v186 = vrcp.pop %v170
    %v187 = vmul.f32 %v170, %v186
    %v188 = vsub.f32 1.0, %v187
    %v189 = vmul.f32 %v186, %v188
    %v190 = vadd.f32 %v186, %v189
    %vm191 = vweird.f32 %v170
    %vm192 = vweird.f32 %v186
    %vm193 = vmor %vm191, %vm192
    %v194 = vsel %vm193, %v186, %v190
    %v195 = vand.u32 2147483647, %v170
    %vm196 = vcmp.eq.f32.partialorder %v195, 8.507059e+37
    %v197 = vand.u32 %v170, 2147483648
    %v198 = vor.u32 1.1754944e-38, %v197
    %v199 = vsel %vm196, %v198, %v194
    %v200 = vmul.f32 1.0, %v199
    %v201 = vmul.f32 %v200, 2.0
    %v202 = vsub.f32 %v201, 1.0
    %v203 = vmul.f32 %v185, 0.0
    %v204 = vmul.f32 %v185, %v202
    %206 = vrot.lane.b32.xlu0 %v204, 64
    %v207 = vpop.permute.xlu0 %206
    %v209 = vadd.f32 %v203, %v207
    %v210 = vtanh.pop %v209
    %v211 = vmul.f32 %v200, %v210
    %213 = vrot.lane.b32.xlu0 %v211, 64
    %v214 = vpop.permute.xlu0 %213
    %v216 = vsel %vm116, %v214, 0.0
    %218 = vrot.lane.b32.xlu0 %v209, 64
    %v219 = vpop.permute.xlu0 %218
    %v221 = vsel %vm116, %v219, 0.0
    %v223 = vsel %vm117, %v216, 0
    %225 = vmatpush.msra.mxu0 0.0
    %226 = vmatpush.msra.mxu0 0.0
    %227 = vmatpush.msra.mxu0 0.0
    %228 = vmatpush.msra.mxu0 0.0
    %229 = vmatpush.msra.mxu0 0.0
    %230 = vmatpush.msra.mxu0 0.0
    %231 = vmatpush.msra.mxu0 0.0
    %232 = vmatpush.msra.mxu0 0.0
    %233 = vmatpush.msra.mxu0 %v41
    %234 = vmatpush.msra.mxu0 %v39
    %235 = vmatpush.msra.mxu0 %v37
    %236 = vmatpush.msra.mxu0 %v35
    %237 = vmatpush.msra.mxu0 %v33
    %238 = vmatpush.msra.mxu0 %v31
    %239 = vmatpush.msra.mxu0 %v29
    %240 = vmatpush.msra.mxu0 %v27
    %241 = vmatmul.f32.gmra.mxu0 %v223
    %v242 = vpop.f32.mrf.mxu0
    %v243 = vadd.f32 0.0, %v242
    %244 = vdwg.mxu0
    %245 = vmatpush.msra.mxu0 0.0
    %246 = vmatpush.msra.mxu0 0.0
    %247 = vmatpush.msra.mxu0 0.0
    %248 = vmatpush.msra.mxu0 0.0
    %249 = vmatpush.msra.mxu0 0.0
    %250 = vmatpush.msra.mxu0 0.0
    %251 = vmatpush.msra.mxu0 0.0
    %252 = vmatpush.msra.mxu0 0.0
    %253 = vmatpush.msra.mxu0 %v42
    %254 = vmatpush.msra.mxu0 %v40
    %255 = vmatpush.msra.mxu0 %v38
    %256 = vmatpush.msra.mxu0 %v36
    %257 = vmatpush.msra.mxu0 %v34
    %258 = vmatpush.msra.mxu0 %v32
    %259 = vmatpush.msra.mxu0 %v30
    %260 = vmatpush.msra.mxu0 %v28
    %261 = vmatmul.f32.gmra.mxu0 %v223
    %v262 = vpop.f32.mrf.mxu0
    %v263 = vadd.f32 0.0, %v262
    %264 = vdwg.mxu0
    %v267 = vrot.slane %v243, 7
    %v268 = vrot.slane %v263, 7
    %v271 = vadd.f32 %v86, %v267
    %v272 = vadd.f32 %v109, %v268
    %v273 = vxor.u32 %v271, 2147483648
    %v274 = vxor.u32 %v272, 2147483648
    %v275 = vmul.f32 %v273, 1.442695
    %v276 = vpow.pop %v275
    %v277 = vmul.f32 %v274, 1.442695
    %v278 = vpow.pop %v277
    %v279 = vadd.f32 %v276, 1.0
    %v280 = vadd.f32 %v278, 1.0
    %v281 = vrcp.pop %v279
    %v282 = vmul.f32 %v279, %v281
    %v283 = vsub.f32 1.0, %v282
    %v284 = vmul.f32 %v281, %v283
    %v285 = vadd.f32 %v281, %v284
    %vm286 = vweird.f32 %v279
    %vm287 = vweird.f32 %v281
    %vm288 = vmor %vm286, %vm287
    %v289 = vsel %vm288, %v281, %v285
    %v290 = vand.u32 2147483647, %v279
    %vm291 = vcmp.eq.f32.partialorder %v290, 8.507059e+37
    %v292 = vand.u32 %v279, 2147483648
    %v293 = vor.u32 1.1754944e-38, %v292
    %v294 = vsel %vm291, %v293, %v289
    %v295 = vmul.f32 1.0, %v294
    %v296 = vrcp.pop %v280
    %v297 = vmul.f32 %v280, %v296
    %v298 = vsub.f32 1.0, %v297
    %v299 = vmul.f32 %v296, %v298
    %v300 = vadd.f32 %v296, %v299
    %vm301 = vweird.f32 %v280
    %vm302 = vweird.f32 %v296
    %vm303 = vmor %vm301, %vm302
    %v304 = vsel %vm303, %v296, %v300
    %v305 = vand.u32 2147483647, %v280
    %vm306 = vcmp.eq.f32.partialorder %v305, 8.507059e+37
    %v307 = vand.u32 %v280, 2147483648
    %v308 = vor.u32 1.1754944e-38, %v307
    %v309 = vsel %vm306, %v308, %v304
    %v310 = vmul.f32 1.0, %v309
    %v311 = vmul.f32 %v310, 2.0
    %v312 = vsub.f32 %v311, 1.0
    %v314 = vrot.slane %v221, 7
    %315 = vrot.lane.b32.xlu0 %v314, 64
    %v316 = vpop.permute.xlu0 %315
    %v318 = vmul.f32 %v295, %v316
    %v319 = vmul.f32 %v295, %v312
    %321 = vrot.lane.b32.xlu0 %v319, 64
    %v322 = vpop.permute.xlu0 %321
    %v324 = vadd.f32 %v318, %v322
    %v325 = vtanh.pop %v324
    %v326 = vmul.f32 %v310, %v325
    %v328 = vrot.slane %v326, 1
    %329 = vrot.lane.b32.xlu0 %v328, 64
    %v330 = vpop.permute.xlu0 %329
    %v331 = vsel %vm117, %v330, 0
    %333 = vmatpush.msra.mxu0 0.0
    %334 = vmatpush.msra.mxu0 0.0
    %335 = vmatpush.msra.mxu0 0.0
    %336 = vmatpush.msra.mxu0 0.0
    %337 = vmatpush.msra.mxu0 0.0
    %338 = vmatpush.msra.mxu0 0.0
    %339 = vmatpush.msra.mxu0 0.0
    %340 = vmatpush.msra.mxu0 0.0
    %341 = vmatpush.msra.mxu0 %v41
    %342 = vmatpush.msra.mxu0 %v39
    %343 = vmatpush.msra.mxu0 %v37
    %344 = vmatpush.msra.mxu0 %v35
    %345 = vmatpush.msra.mxu0 %v33
    %346 = vmatpush.msra.mxu0 %v31
    %347 = vmatpush.msra.mxu0 %v29
    %348 = vmatpush.msra.mxu0 %v27
    %349 = vmatmul.f32.gmra.mxu0 %v331
    %v350 = vpop.f32.mrf.mxu0
    %v351 = vadd.f32 0.0, %v350
    %352 = vdwg.mxu0
    %353 = vmatpush.msra.mxu0 0.0
    %354 = vmatpush.msra.mxu0 0.0
    %355 = vmatpush.msra.mxu0 0.0
    %356 = vmatpush.msra.mxu0 0.0
    %357 = vmatpush.msra.mxu0 0.0
    %358 = vmatpush.msra.mxu0 0.0
    %359 = vmatpush.msra.mxu0 0.0
    %360 = vmatpush.msra.mxu0 0.0
    %361 = vmatpush.msra.mxu0 %v42
    %362 = vmatpush.msra.mxu0 %v40
    %363 = vmatpush.msra.mxu0 %v38
    %364 = vmatpush.msra.mxu0 %v36
    %365 = vmatpush.msra.mxu0 %v34
    %366 = vmatpush.msra.mxu0 %v32
    %367 = vmatpush.msra.mxu0 %v30
    %368 = vmatpush.msra.mxu0 %v28
    %369 = vmatmul.f32.gmra.mxu0 %v331
    %v370 = vpop.f32.mrf.mxu0
    %v371 = vadd.f32 0.0, %v370
    %372 = vdwg.mxu0
    %v375 = vrot.slane %v351, 6
    %v376 = vrot.slane %v371, 6
    %v379 = vadd.f32 %v86, %v375
    %v380 = vadd.f32 %v109, %v376
    %v381 = vxor.u32 %v379, 2147483648
    %v382 = vxor.u32 %v380, 2147483648
    %v383 = vmul.f32 %v381, 1.442695
    %v384 = vpow.pop %v383
    %v385 = vmul.f32 %v382, 1.442695
    %v386 = vpow.pop %v385
    %v387 = vadd.f32 %v384, 1.0
    %v388 = vadd.f32 %v386, 1.0
    %v389 = vrcp.pop %v387
    %v390 = vmul.f32 %v387, %v389
    %v391 = vsub.f32 1.0, %v390
    %v392 = vmul.f32 %v389, %v391
    %v393 = vadd.f32 %v389, %v392
    %vm394 = vweird.f32 %v387
    %vm395 = vweird.f32 %v389
    %vm396 = vmor %vm394, %vm395
    %v397 = vsel %vm396, %v389, %v393
    %v398 = vand.u32 2147483647, %v387
    %vm399 = vcmp.eq.f32.partialorder %v398, 8.507059e+37
    %v400 = vand.u32 %v387, 2147483648
    %v401 = vor.u32 1.1754944e-38, %v400
    %v402 = vsel %vm399, %v401, %v397
    %v403 = vmul.f32 1.0, %v402
    %v404 = vrcp.pop %v388
    %v405 = vmul.f32 %v388, %v404
    %v406 = vsub.f32 1.0, %v405
    %v407 = vmul.f32 %v404, %v406
    %v408 = vadd.f32 %v404, %v407
    %vm409 = vweird.f32 %v388
    %vm410 = vweird.f32 %v404
    %vm411 = vmor %vm409, %vm410
    %v412 = vsel %vm411, %v404, %v408
    %v413 = vand.u32 2147483647, %v388
    %vm414 = vcmp.eq.f32.partialorder %v413, 8.507059e+37
    %v415 = vand.u32 %v388, 2147483648
    %v416 = vor.u32 1.1754944e-38, %v415
    %v417 = vsel %vm414, %v416, %v412
    %v418 = vmul.f32 1.0, %v417
    %v419 = vmul.f32 %v418, 2.0
    %v420 = vsub.f32 %v419, 1.0
    %v422 = vrot.slane %v324, 7
    %v424 = vmul.f32 %v403, %v422
    %v425 = vmul.f32 %v403, %v420
    %427 = vrot.lane.b32.xlu0 %v425, 64
    %v428 = vpop.permute.xlu0 %427
    %v430 = vadd.f32 %v424, %v428
    %v431 = vtanh.pop %v430
    %v432 = vmul.f32 %v418, %v431
    %v434 = vrot.slane %v432, 2
    %435 = vrot.lane.b32.xlu0 %v434, 64
    %v436 = vpop.permute.xlu0 %435
    %v437 = vsel %vm117, %v436, 0
    %439 = vmatpush.msra.mxu0 0.0
    %440 = vmatpush.msra.mxu0 0.0
    %441 = vmatpush.msra.mxu0 0.0
    %442 = vmatpush.msra.mxu0 0.0
    %443 = vmatpush.msra.mxu0 0.0
    %444 = vmatpush.msra.mxu0 0.0
    %445 = vmatpush.msra.mxu0 0.0
    %446 = vmatpush.msra.mxu0 0.0
    %447 = vmatpush.msra.mxu0 %v41
    %448 = vmatpush.msra.mxu0 %v39
    %449 = vmatpush.msra.mxu0 %v37
    %450 = vmatpush.msra.mxu0 %v35
    %451 = vmatpush.msra.mxu0 %v33
    %452 = vmatpush.msra.mxu0 %v31
    %453 = vmatpush.msra.mxu0 %v29
    %454 = vmatpush.msra.mxu0 %v27
    %455 = vmatmul.f32.gmra.mxu0 %v437
    %v456 = vpop.f32.mrf.mxu0
    %v457 = vadd.f32 0.0, %v456
    %458 = vdwg.mxu0
    %459 = vmatpush.msra.mxu0 0.0
    %460 = vmatpush.msra.mxu0 0.0
    %461 = vmatpush.msra.mxu0 0.0
    %462 = vmatpush.msra.mxu0 0.0
    %463 = vmatpush.msra.mxu0 0.0
    %464 = vmatpush.msra.mxu0 0.0
    %465 = vmatpush.msra.mxu0 0.0
    %466 = vmatpush.msra.mxu0 0.0
    %467 = vmatpush.msra.mxu0 %v42
    %468 = vmatpush.msra.mxu0 %v40
    %469 = vmatpush.msra.mxu0 %v38
    %470 = vmatpush.msra.mxu0 %v36
    %471 = vmatpush.msra.mxu0 %v34
    %472 = vmatpush.msra.mxu0 %v32
    %473 = vmatpush.msra.mxu0 %v30
    %474 = vmatpush.msra.mxu0 %v28
    %475 = vmatmul.f32.gmra.mxu0 %v437
    %v476 = vpop.f32.mrf.mxu0
    %v477 = vadd.f32 0.0, %v476
    %478 = vdwg.mxu0
    %v481 = vrot.slane %v457, 5
    %v482 = vrot.slane %v477, 5
    %v485 = vadd.f32 %v86, %v481
    %v486 = vadd.f32 %v109, %v482
    %v487 = vxor.u32 %v485, 2147483648
    %v488 = vxor.u32 %v486, 2147483648
    %v489 = vmul.f32 %v487, 1.442695
    %v490 = vpow.pop %v489
    %v491 = vmul.f32 %v488, 1.442695
    %v492 = vpow.pop %v491
    %v493 = vadd.f32 %v490, 1.0
    %v494 = vadd.f32 %v492, 1.0
    %v495 = vrcp.pop %v493
    %v496 = vmul.f32 %v493, %v495
    %v497 = vsub.f32 1.0, %v496
    %v498 = vmul.f32 %v495, %v497
    %v499 = vadd.f32 %v495, %v498
    %vm500 = vweird.f32 %v493
    %vm501 = vweird.f32 %v495
    %vm502 = vmor %vm500, %vm501
    %v503 = vsel %vm502, %v495, %v499
    %v504 = vand.u32 2147483647, %v493
    %vm505 = vcmp.eq.f32.partialorder %v504, 8.507059e+37
    %v506 = vand.u32 %v493, 2147483648
    %v507 = vor.u32 1.1754944e-38, %v506
    %v508 = vsel %vm505, %v507, %v503
    %v509 = vmul.f32 1.0, %v508
    %v510 = vrcp.pop %v494
    %v511 = vmul.f32 %v494, %v510
    %v512 = vsub.f32 1.0, %v511
    %v513 = vmul.f32 %v510, %v512
    %v514 = vadd.f32 %v510, %v513
    %vm515 = vweird.f32 %v494
    %vm516 = vweird.f32 %v510
    %vm517 = vmor %vm515, %vm516
    %v518 = vsel %vm517, %v510, %v514
    %v519 = vand.u32 2147483647, %v494
    %vm520 = vcmp.eq.f32.partialorder %v519, 8.507059e+37
    %v521 = vand.u32 %v494, 2147483648
    %v522 = vor.u32 1.1754944e-38, %v521
    %v523 = vsel %vm520, %v522, %v518
    %v524 = vmul.f32 1.0, %v523
    %v525 = vmul.f32 %v524, 2.0
    %v526 = vsub.f32 %v525, 1.0
    %v528 = vrot.slane %v430, 7
    %v530 = vmul.f32 %v509, %v528
    %v531 = vmul.f32 %v509, %v526
    %533 = vrot.lane.b32.xlu0 %v531, 64
    %v534 = vpop.permute.xlu0 %533
    %v536 = vadd.f32 %v530, %v534
    %v537 = vtanh.pop %v536
    %v538 = vmul.f32 %v524, %v537
    %v540 = vrot.slane %v538, 3
    %541 = vrot.lane.b32.xlu0 %v540, 64
    %v542 = vpop.permute.xlu0 %541
    %v543 = vsel %vm117, %v542, 0
    %545 = vmatpush.msra.mxu0 0.0
    %546 = vmatpush.msra.mxu0 0.0
    %547 = vmatpush.msra.mxu0 0.0
    %548 = vmatpush.msra.mxu0 0.0
    %549 = vmatpush.msra.mxu0 0.0
    %550 = vmatpush.msra.mxu0 0.0
    %551 = vmatpush.msra.mxu0 0.0
    %552 = vmatpush.msra.mxu0 0.0
    %553 = vmatpush.msra.mxu0 %v41
    %554 = vmatpush.msra.mxu0 %v39
    %555 = vmatpush.msra.mxu0 %v37
    %556 = vmatpush.msra.mxu0 %v35
    %557 = vmatpush.msra.mxu0 %v33
    %558 = vmatpush.msra.mxu0 %v31
    %559 = vmatpush.msra.mxu0 %v29
    %560 = vmatpush.msra.mxu0 %v27
    %561 = vmatmul.f32.gmra.mxu0 %v543
    %v562 = vpop.f32.mrf.mxu0
    %v563 = vadd.f32 0.0, %v562
    %564 = vdwg.mxu0
    %565 = vmatpush.msra.mxu0 0.0
    %566 = vmatpush.msra.mxu0 0.0
    %567 = vmatpush.msra.mxu0 0.0
    %568 = vmatpush.msra.mxu0 0.0
    %569 = vmatpush.msra.mxu0 0.0
    %570 = vmatpush.msra.mxu0 0.0
    %571 = vmatpush.msra.mxu0 0.0
    %572 = vmatpush.msra.mxu0 0.0
    %573 = vmatpush.msra.mxu0 %v42
    %574 = vmatpush.msra.mxu0 %v40
    %575 = vmatpush.msra.mxu0 %v38
    %576 = vmatpush.msra.mxu0 %v36
    %577 = vmatpush.msra.mxu0 %v34
    %578 = vmatpush.msra.mxu0 %v32
    %579 = vmatpush.msra.mxu0 %v30
    %580 = vmatpush.msra.mxu0 %v28
    %581 = vmatmul.f32.gmra.mxu0 %v543
    %v582 = vpop.f32.mrf.mxu0
    %v583 = vadd.f32 0.0, %v582
    %584 = vdwg.mxu0
    %v587 = vrot.slane %v563, 4
    %v588 = vrot.slane %v583, 4
    %v591 = vadd.f32 %v86, %v587
    %v592 = vadd.f32 %v109, %v588
    %v593 = vxor.u32 %v591, 2147483648
    %v594 = vxor.u32 %v592, 2147483648
    %v595 = vmul.f32 %v593, 1.442695
    %v596 = vpow.pop %v595
    %v597 = vmul.f32 %v594, 1.442695
    %v598 = vpow.pop %v597
    %v599 = vadd.f32 %v596, 1.0
    %v600 = vadd.f32 %v598, 1.0
    %v601 = vrcp.pop %v599
    %v602 = vmul.f32 %v599, %v601
    %v603 = vsub.f32 1.0, %v602
    %v604 = vmul.f32 %v601, %v603
    %v605 = vadd.f32 %v601, %v604
    %vm606 = vweird.f32 %v599
    %vm607 = vweird.f32 %v601
    %vm608 = vmor %vm606, %vm607
    %v609 = vsel %vm608, %v601, %v605
    %v610 = vand.u32 2147483647, %v599
    %vm611 = vcmp.eq.f32.partialorder %v610, 8.507059e+37
    %v612 = vand.u32 %v599, 2147483648
    %v613 = vor.u32 1.1754944e-38, %v612
    %v614 = vsel %vm611, %v613, %v609
    %v615 = vmul.f32 1.0, %v614
    %v616 = vrcp.pop %v600
    %v617 = vmul.f32 %v600, %v616
    %v618 = vsub.f32 1.0, %v617
    %v619 = vmul.f32 %v616, %v618
    %v620 = vadd.f32 %v616, %v619
    %vm621 = vweird.f32 %v600
    %vm622 = vweird.f32 %v616
    %vm623 = vmor %vm621, %vm622
    %v624 = vsel %vm623, %v616, %v620
    %v625 = vand.u32 2147483647, %v600
    %vm626 = vcmp.eq.f32.partialorder %v625, 8.507059e+37
    %v627 = vand.u32 %v600, 2147483648
    %v628 = vor.u32 1.1754944e-38, %v627
    %v629 = vsel %vm626, %v628, %v624
    %v630 = vmul.f32 1.0, %v629
    %v631 = vmul.f32 %v630, 2.0
    %v632 = vsub.f32 %v631, 1.0
    %v634 = vrot.slane %v536, 7
    %v636 = vmul.f32 %v615, %v634
    %v637 = vmul.f32 %v615, %v632
    %639 = vrot.lane.b32.xlu0 %v637, 64
    %v640 = vpop.permute.xlu0 %639
    %v642 = vadd.f32 %v636, %v640
    %v643 = vtanh.pop %v642
    %v644 = vmul.f32 %v630, %v643
    %v646 = vrot.slane %v644, 4
    %647 = vrot.lane.b32.xlu0 %v646, 64
    %v648 = vpop.permute.xlu0 %647
    %v649 = vsel %vm117, %v648, 0
    %651 = vmatpush.msra.mxu0 0.0
    %652 = vmatpush.msra.mxu0 0.0
    %653 = vmatpush.msra.mxu0 0.0
    %654 = vmatpush.msra.mxu0 0.0
    %655 = vmatpush.msra.mxu0 0.0
    %656 = vmatpush.msra.mxu0 0.0
    %657 = vmatpush.msra.mxu0 0.0
    %658 = vmatpush.msra.mxu0 0.0
    %659 = vmatpush.msra.mxu0 %v41
    %660 = vmatpush.msra.mxu0 %v39
    %661 = vmatpush.msra.mxu0 %v37
    %662 = vmatpush.msra.mxu0 %v35
    %663 = vmatpush.msra.mxu0 %v33
    %664 = vmatpush.msra.mxu0 %v31
    %665 = vmatpush.msra.mxu0 %v29
    %666 = vmatpush.msra.mxu0 %v27
    %667 = vmatmul.f32.gmra.mxu0 %v649
    %v668 = vpop.f32.mrf.mxu0
    %v669 = vadd.f32 0.0, %v668
    %670 = vdwg.mxu0
    %671 = vmatpush.msra.mxu0 0.0
    %672 = vmatpush.msra.mxu0 0.0
    %673 = vmatpush.msra.mxu0 0.0
    %674 = vmatpush.msra.mxu0 0.0
    %675 = vmatpush.msra.mxu0 0.0
    %676 = vmatpush.msra.mxu0 0.0
    %677 = vmatpush.msra.mxu0 0.0
    %678 = vmatpush.msra.mxu0 0.0
    %679 = vmatpush.msra.mxu0 %v42
    %680 = vmatpush.msra.mxu0 %v40
    %681 = vmatpush.msra.mxu0 %v38
    %682 = vmatpush.msra.mxu0 %v36
    %683 = vmatpush.msra.mxu0 %v34
    %684 = vmatpush.msra.mxu0 %v32
    %685 = vmatpush.msra.mxu0 %v30
    %686 = vmatpush.msra.mxu0 %v28
    %687 = vmatmul.f32.gmra.mxu0 %v649
    %v688 = vpop.f32.mrf.mxu0
    %v689 = vadd.f32 0.0, %v688
    %690 = vdwg.mxu0
    %v693 = vrot.slane %v669, 3
    %v694 = vrot.slane %v689, 3
    %v697 = vadd.f32 %v86, %v693
    %v698 = vadd.f32 %v109, %v694
    %v699 = vxor.u32 %v697, 2147483648
    %v700 = vxor.u32 %v698, 2147483648
    %v701 = vmul.f32 %v699, 1.442695
    %v702 = vpow.pop %v701
    %v703 = vmul.f32 %v700, 1.442695
    %v704 = vpow.pop %v703
    %v705 = vadd.f32 %v702, 1.0
    %v706 = vadd.f32 %v704, 1.0
    %v707 = vrcp.pop %v705
    %v708 = vmul.f32 %v705, %v707
    %v709 = vsub.f32 1.0, %v708
    %v710 = vmul.f32 %v707, %v709
    %v711 = vadd.f32 %v707, %v710
    %vm712 = vweird.f32 %v705
    %vm713 = vweird.f32 %v707
    %vm714 = vmor %vm712, %vm713
    %v715 = vsel %vm714, %v707, %v711
    %v716 = vand.u32 2147483647, %v705
    %vm717 = vcmp.eq.f32.partialorder %v716, 8.507059e+37
    %v718 = vand.u32 %v705, 2147483648
    %v719 = vor.u32 1.1754944e-38, %v718
    %v720 = vsel %vm717, %v719, %v715
    %v721 = vmul.f32 1.0, %v720
    %v722 = vrcp.pop %v706
    %v723 = vmul.f32 %v706, %v722
    %v724 = vsub.f32 1.0, %v723
    %v725 = vmul.f32 %v722, %v724
    %v726 = vadd.f32 %v722, %v725
    %vm727 = vweird.f32 %v706
    %vm728 = vweird.f32 %v722
    %vm729 = vmor %vm727, %vm728
    %v730 = vsel %vm729, %v722, %v726
    %v731 = vand.u32 2147483647, %v706
    %vm732 = vcmp.eq.f32.partialorder %v731, 8.507059e+37
    %v733 = vand.u32 %v706, 2147483648
    %v734 = vor.u32 1.1754944e-38, %v733
    %v735 = vsel %vm732, %v734, %v730
    %v736 = vmul.f32 1.0, %v735
    %v737 = vmul.f32 %v736, 2.0
    %v738 = vsub.f32 %v737, 1.0
    %v740 = vrot.slane %v642, 7
    %v742 = vmul.f32 %v721, %v740
    %v743 = vmul.f32 %v721, %v738
    %745 = vrot.lane.b32.xlu0 %v743, 64
    %v746 = vpop.permute.xlu0 %745
    %v748 = vadd.f32 %v742, %v746
    %v749 = vtanh.pop %v748
    %v750 = vmul.f32 %v736, %v749
    %v752 = vrot.slane %v750, 5
    %753 = vrot.lane.b32.xlu0 %v752, 64
    %v754 = vpop.permute.xlu0 %753
    %v755 = vsel %vm117, %v754, 0
    %757 = vmatpush.msra.mxu0 0.0
    %758 = vmatpush.msra.mxu0 0.0
    %759 = vmatpush.msra.mxu0 0.0
    %760 = vmatpush.msra.mxu0 0.0
    %761 = vmatpush.msra.mxu0 0.0
    %762 = vmatpush.msra.mxu0 0.0
    %763 = vmatpush.msra.mxu0 0.0
    %764 = vmatpush.msra.mxu0 0.0
    %765 = vmatpush.msra.mxu0 %v41
    %766 = vmatpush.msra.mxu0 %v39
    %767 = vmatpush.msra.mxu0 %v37
    %768 = vmatpush.msra.mxu0 %v35
    %769 = vmatpush.msra.mxu0 %v33
    %770 = vmatpush.msra.mxu0 %v31
    %771 = vmatpush.msra.mxu0 %v29
    %772 = vmatpush.msra.mxu0 %v27
    %773 = vmatmul.f32.gmra.mxu0 %v755
    %v774 = vpop.f32.mrf.mxu0
    %v775 = vadd.f32 0.0, %v774
    %776 = vdwg.mxu0
    %777 = vmatpush.msra.mxu0 0.0
    %778 = vmatpush.msra.mxu0 0.0
    %779 = vmatpush.msra.mxu0 0.0
    %780 = vmatpush.msra.mxu0 0.0
    %781 = vmatpush.msra.mxu0 0.0
    %782 = vmatpush.msra.mxu0 0.0
    %783 = vmatpush.msra.mxu0 0.0
    %784 = vmatpush.msra.mxu0 0.0
    %785 = vmatpush.msra.mxu0 %v42
    %786 = vmatpush.msra.mxu0 %v40
    %787 = vmatpush.msra.mxu0 %v38
    %788 = vmatpush.msra.mxu0 %v36
    %789 = vmatpush.msra.mxu0 %v34
    %790 = vmatpush.msra.mxu0 %v32
    %791 = vmatpush.msra.mxu0 %v30
    %792 = vmatpush.msra.mxu0 %v28
    %793 = vmatmul.f32.gmra.mxu0 %v755
    %v794 = vpop.f32.mrf.mxu0
    %v795 = vadd.f32 0.0, %v794
    %796 = vdwg.mxu0
    %v799 = vrot.slane %v775, 2
    %v800 = vrot.slane %v795, 2
    %v803 = vadd.f32 %v86, %v799
    %v804 = vadd.f32 %v109, %v800
    %v805 = vxor.u32 %v803, 2147483648
    %v806 = vxor.u32 %v804, 2147483648
    %v807 = vmul.f32 %v805, 1.442695
    %v808 = vpow.pop %v807
    %v809 = vmul.f32 %v806, 1.442695
    %v810 = vpow.pop %v809
    %v811 = vadd.f32 %v808, 1.0
    %v812 = vadd.f32 %v810, 1.0
    %v813 = vrcp.pop %v811
    %v814 = vmul.f32 %v811, %v813
    %v815 = vsub.f32 1.0, %v814
    %v816 = vmul.f32 %v813, %v815
    %v817 = vadd.f32 %v813, %v816
    %vm818 = vweird.f32 %v811
    %vm819 = vweird.f32 %v813
    %vm820 = vmor %vm818, %vm819
    %v821 = vsel %vm820, %v813, %v817
    %v822 = vand.u32 2147483647, %v811
    %vm823 = vcmp.eq.f32.partialorder %v822, 8.507059e+37
    %v824 = vand.u32 %v811, 2147483648
    %v825 = vor.u32 1.1754944e-38, %v824
    %v826 = vsel %vm823, %v825, %v821
    %v827 = vmul.f32 1.0, %v826
    %v828 = vrcp.pop %v812
    %v829 = vmul.f32 %v812, %v828
    %v830 = vsub.f32 1.0, %v829
    %v831 = vmul.f32 %v828, %v830
    %v832 = vadd.f32 %v828, %v831
    %vm833 = vweird.f32 %v812
    %vm834 = vweird.f32 %v828
    %vm835 = vmor %vm833, %vm834
    %v836 = vsel %vm835, %v828, %v832
    %v837 = vand.u32 2147483647, %v812
    %vm838 = vcmp.eq.f32.partialorder %v837, 8.507059e+37
    %v839 = vand.u32 %v812, 2147483648
    %v840 = vor.u32 1.1754944e-38, %v839
    %v841 = vsel %vm838, %v840, %v836
    %v842 = vmul.f32 1.0, %v841
    %v843 = vmul.f32 %v842, 2.0
    %v844 = vsub.f32 %v843, 1.0
    %v846 = vrot.slane %v748, 7
    %v848 = vmul.f32 %v827, %v846
    %v849 = vmul.f32 %v827, %v844
    %851 = vrot.lane.b32.xlu0 %v849, 64
    %v852 = vpop.permute.xlu0 %851
    %v854 = vadd.f32 %v848, %v852
    %v855 = vtanh.pop %v854
    %v856 = vmul.f32 %v842, %v855
    %v858 = vrot.slane %v856, 6
    %859 = vrot.lane.b32.xlu0 %v858, 64
    %v860 = vpop.permute.xlu0 %859
    %v861 = vsel %vm117, %v860, 0
    %863 = vmatpush.msra.mxu0 0.0
    %864 = vmatpush.msra.mxu0 0.0
    %865 = vmatpush.msra.mxu0 0.0
    %866 = vmatpush.msra.mxu0 0.0
    %867 = vmatpush.msra.mxu0 0.0
    %868 = vmatpush.msra.mxu0 0.0
    %869 = vmatpush.msra.mxu0 0.0
    %870 = vmatpush.msra.mxu0 0.0
    %871 = vmatpush.msra.mxu0 %v41
    %872 = vmatpush.msra.mxu0 %v39
    %873 = vmatpush.msra.mxu0 %v37
    %874 = vmatpush.msra.mxu0 %v35
    %875 = vmatpush.msra.mxu0 %v33
    %876 = vmatpush.msra.mxu0 %v31
    %877 = vmatpush.msra.mxu0 %v29
    %878 = vmatpush.msra.mxu0 %v27
    %879 = vmatmul.f32.gmra.mxu0 %v861
    %v880 = vpop.f32.mrf.mxu0
    %v881 = vadd.f32 0.0, %v880
    %882 = vdwg.mxu0
    %883 = vmatpush.msra.mxu0 0.0
    %884 = vmatpush.msra.mxu0 0.0
    %885 = vmatpush.msra.mxu0 0.0
    %886 = vmatpush.msra.mxu0 0.0
    %887 = vmatpush.msra.mxu0 0.0
    %888 = vmatpush.msra.mxu0 0.0
    %889 = vmatpush.msra.mxu0 0.0
    %890 = vmatpush.msra.mxu0 0.0
    %891 = vmatpush.msra.mxu0 %v42
    %892 = vmatpush.msra.mxu0 %v40
    %893 = vmatpush.msra.mxu0 %v38
    %894 = vmatpush.msra.mxu0 %v36
    %895 = vmatpush.msra.mxu0 %v34
    %896 = vmatpush.msra.mxu0 %v32
    %897 = vmatpush.msra.mxu0 %v30
    %898 = vmatpush.msra.mxu0 %v28
    %899 = vmatmul.f32.gmra.mxu0 %v861
    %v900 = vpop.f32.mrf.mxu0
    %v901 = vadd.f32 0.0, %v900
    %902 = vdwg.mxu0
    %v905 = vrot.slane %v881, 1
    %v906 = vrot.slane %v901, 1
    %v909 = vadd.f32 %v86, %v905
    %v910 = vadd.f32 %v109, %v906
    %v911 = vxor.u32 %v909, 2147483648
    %v912 = vxor.u32 %v910, 2147483648
    %v913 = vmul.f32 %v911, 1.442695
    %v914 = vpow.pop %v913
    %v915 = vmul.f32 %v912, 1.442695
    %v916 = vpow.pop %v915
    %v917 = vadd.f32 %v914, 1.0
    %v918 = vadd.f32 %v916, 1.0
    %v919 = vrcp.pop %v917
    %v920 = vmul.f32 %v917, %v919
    %v921 = vsub.f32 1.0, %v920
    %v922 = vmul.f32 %v919, %v921
    %v923 = vadd.f32 %v919, %v922
    %vm924 = vweird.f32 %v917
    %vm925 = vweird.f32 %v919
    %vm926 = vmor %vm924, %vm925
    %v927 = vsel %vm926, %v919, %v923
    %v928 = vand.u32 2147483647, %v917
    %vm929 = vcmp.eq.f32.partialorder %v928, 8.507059e+37
    %v930 = vand.u32 %v917, 2147483648
    %v931 = vor.u32 1.1754944e-38, %v930
    %v932 = vsel %vm929, %v931, %v927
    %v933 = vmul.f32 1.0, %v932
    %v934 = vrcp.pop %v918
    %v935 = vmul.f32 %v918, %v934
    %v936 = vsub.f32 1.0, %v935
    %v937 = vmul.f32 %v934, %v936
    %v938 = vadd.f32 %v934, %v937
    %vm939 = vweird.f32 %v918
    %vm940 = vweird.f32 %v934
    %vm941 = vmor %vm939, %vm940
    %v942 = vsel %vm941, %v934, %v938
    %v943 = vand.u32 2147483647, %v918
    %vm944 = vcmp.eq.f32.partialorder %v943, 8.507059e+37
    %v945 = vand.u32 %v918, 2147483648
    %v946 = vor.u32 1.1754944e-38, %v945
    %v947 = vsel %vm944, %v946, %v942
    %v948 = vmul.f32 1.0, %v947
    %v949 = vmul.f32 %v948, 2.0
    %v950 = vsub.f32 %v949, 1.0
    %v952 = vrot.slane %v854, 7
    %v954 = vmul.f32 %v933, %v952
    %v955 = vmul.f32 %v933, %v950
    %957 = vrot.lane.b32.xlu0 %v955, 64
    %v958 = vpop.permute.xlu0 %957
    %v960 = vadd.f32 %v954, %v958
    %v961 = vtanh.pop %v960
    %v962 = vmul.f32 %v948, %v961
    %v964 = vrot.slane %v962, 7
    %965 = vrot.lane.b32.xlu0 %v964, 64
    %v966 = vpop.permute.xlu0 %965
    %v967 = vsel %vm117, %v966, 0
    %969 = vmatpush.msra.mxu0 0.0
    %970 = vmatpush.msra.mxu0 0.0
    %971 = vmatpush.msra.mxu0 0.0
    %972 = vmatpush.msra.mxu0 0.0
    %973 = vmatpush.msra.mxu0 0.0
    %974 = vmatpush.msra.mxu0 0.0
    %975 = vmatpush.msra.mxu0 0.0
    %976 = vmatpush.msra.mxu0 0.0
    %977 = vmatpush.msra.mxu0 %v41
    %978 = vmatpush.msra.mxu0 %v39
    %979 = vmatpush.msra.mxu0 %v37
    %980 = vmatpush.msra.mxu0 %v35
    %981 = vmatpush.msra.mxu0 %v33
    %982 = vmatpush.msra.mxu0 %v31
    %983 = vmatpush.msra.mxu0 %v29
    %984 = vmatpush.msra.mxu0 %v27
    %985 = vmatmul.f32.gmra.mxu0 %v967
    %v986 = vpop.f32.mrf.mxu0
    %v987 = vadd.f32 0.0, %v986
    %988 = vdwg.mxu0
    %989 = vmatpush.msra.mxu0 0.0
    %990 = vmatpush.msra.mxu0 0.0
    %991 = vmatpush.msra.mxu0 0.0
    %992 = vmatpush.msra.mxu0 0.0
    %993 = vmatpush.msra.mxu0 0.0
    %994 = vmatpush.msra.mxu0 0.0
    %995 = vmatpush.msra.mxu0 0.0
    %996 = vmatpush.msra.mxu0 0.0
    %997 = vmatpush.msra.mxu0 %v42
    %998 = vmatpush.msra.mxu0 %v40
    %999 = vmatpush.msra.mxu0 %v38
    %1000 = vmatpush.msra.mxu0 %v36
    %1001 = vmatpush.msra.mxu0 %v34
    %1002 = vmatpush.msra.mxu0 %v32
    %1003 = vmatpush.msra.mxu0 %v30
    %1004 = vmatpush.msra.mxu0 %v28
    %1005 = vmatmul.f32.gmra.mxu0 %v967
    %v1006 = vpop.f32.mrf.mxu0
    %v1007 = vadd.f32 0.0, %v1006
    %1008 = vdwg.mxu0
    %v1009 = vadd.f32 %v89, %v987
    %v1010 = vadd.f32 %v112, %v1007
    %v1011 = vxor.u32 %v1009, 2147483648
    %v1012 = vxor.u32 %v1010, 2147483648
    %v1013 = vmul.f32 %v1011, 1.442695
    %v1014 = vpow.pop %v1013
    %v1015 = vmul.f32 %v1012, 1.442695
    %v1016 = vpow.pop %v1015
    %v1017 = vadd.f32 %v1014, 1.0
    %v1018 = vadd.f32 %v1016, 1.0
    %v1019 = vrcp.pop %v1017
    %v1020 = vmul.f32 %v1017, %v1019
    %v1021 = vsub.f32 1.0, %v1020
    %v1022 = vmul.f32 %v1019, %v1021
    %v1023 = vadd.f32 %v1019, %v1022
    %vm1024 = vweird.f32 %v1017
    %vm1025 = vweird.f32 %v1019
    %vm1026 = vmor %vm1024, %vm1025
    %v1027 = vsel %vm1026, %v1019, %v1023
    %v1028 = vand.u32 2147483647, %v1017
    %vm1029 = vcmp.eq.f32.partialorder %v1028, 8.507059e+37
    %v1030 = vand.u32 %v1017, 2147483648
    %v1031 = vor.u32 1.1754944e-38, %v1030
    %v1032 = vsel %vm1029, %v1031, %v1027
    %v1033 = vmul.f32 1.0, %v1032
    %v1034 = vrcp.pop %v1018
    %v1035 = vmul.f32 %v1018, %v1034
    %v1036 = vsub.f32 1.0, %v1035
    %v1037 = vmul.f32 %v1034, %v1036
    %v1038 = vadd.f32 %v1034, %v1037
    %vm1039 = vweird.f32 %v1018
    %vm1040 = vweird.f32 %v1034
    %vm1041 = vmor %vm1039, %vm1040
    %v1042 = vsel %vm1041, %v1034, %v1038
    %v1043 = vand.u32 2147483647, %v1018
    %vm1044 = vcmp.eq.f32.partialorder %v1043, 8.507059e+37
    %v1045 = vand.u32 %v1018, 2147483648
    %v1046 = vor.u32 1.1754944e-38, %v1045
    %v1047 = vsel %vm1044, %v1046, %v1042
    %v1048 = vmul.f32 1.0, %v1047
    %v1049 = vmul.f32 %v1048, 2.0
    %v1050 = vsub.f32 %v1049, 1.0
    %v1052 = vrot.slane %v960, 7
    %v1054 = vmul.f32 %v1033, %v1052
    %v1055 = vmul.f32 %v1033, %v1050
    %1057 = vrot.lane.b32.xlu0 %v1055, 64
    %v1058 = vpop.permute.xlu0 %1057
    %v1060 = vadd.f32 %v1054, %v1058
    %v1061 = vtanh.pop %v1060
    %v1062 = vmul.f32 %v1048, %v1061
    %1064 = vrot.lane.b32.xlu0 %v1062, 64
    %v1065 = vpop.permute.xlu0 %1064
    %v1066 = vsel %vm117, %v1065, 0
    %1068 = vmatpush.msra.mxu0 0.0
    %1069 = vmatpush.msra.mxu0 0.0
    %1070 = vmatpush.msra.mxu0 0.0
    %1071 = vmatpush.msra.mxu0 0.0
    %1072 = vmatpush.msra.mxu0 0.0
    %1073 = vmatpush.msra.mxu0 0.0
    %1074 = vmatpush.msra.mxu0 0.0
    %1075 = vmatpush.msra.mxu0 0.0
    %1076 = vmatpush.msra.mxu0 %v41
    %1077 = vmatpush.msra.mxu0 %v39
    %1078 = vmatpush.msra.mxu0 %v37
    %1079 = vmatpush.msra.mxu0 %v35
    %1080 = vmatpush.msra.mxu0 %v33
    %1081 = vmatpush.msra.mxu0 %v31
    %1082 = vmatpush.msra.mxu0 %v29
    %1083 = vmatpush.msra.mxu0 %v27
    %1084 = vmatmul.f32.gmra.mxu0 %v1066
    %v1085 = vpop.f32.mrf.mxu0
    %v1086 = vadd.f32 0.0, %v1085
    %1087 = vdwg.mxu0
    %1088 = vmatpush.msra.mxu0 0.0
    %1089 = vmatpush.msra.mxu0 0.0
    %1090 = vmatpush.msra.mxu0 0.0
    %1091 = vmatpush.msra.mxu0 0.0
    %1092 = vmatpush.msra.mxu0 0.0
    %1093 = vmatpush.msra.mxu0 0.0
    %1094 = vmatpush.msra.mxu0 0.0
    %1095 = vmatpush.msra.mxu0 0.0
    %1096 = vmatpush.msra.mxu0 %v42
    %1097 = vmatpush.msra.mxu0 %v40
    %1098 = vmatpush.msra.mxu0 %v38
    %1099 = vmatpush.msra.mxu0 %v36
    %1100 = vmatpush.msra.mxu0 %v34
    %1101 = vmatpush.msra.mxu0 %v32
    %1102 = vmatpush.msra.mxu0 %v30
    %1103 = vmatpush.msra.mxu0 %v28
    %1104 = vmatmul.f32.gmra.mxu0 %v1066
    %v1105 = vpop.f32.mrf.mxu0
    %v1106 = vadd.f32 0.0, %v1105
    %1107 = vdwg.mxu0
    %v1110 = vrot.slane %v1086, 7
    %v1111 = vrot.slane %v1106, 7
    %v1114 = vadd.f32 %v89, %v1110
    %v1115 = vadd.f32 %v112, %v1111
    %v1116 = vxor.u32 %v1114, 2147483648
    %v1117 = vxor.u32 %v1115, 2147483648
    %v1118 = vmul.f32 %v1116, 1.442695
    %v1119 = vpow.pop %v1118
    %v1120 = vmul.f32 %v1117, 1.442695
    %v1121 = vpow.pop %v1120
    %v1122 = vadd.f32 %v1119, 1.0
    %v1123 = vadd.f32 %v1121, 1.0
    %v1124 = vrcp.pop %v1122
    %v1125 = vmul.f32 %v1122, %v1124
    %v1126 = vsub.f32 1.0, %v1125
    %v1127 = vmul.f32 %v1124, %v1126
    %v1128 = vadd.f32 %v1124, %v1127
    %vm1129 = vweird.f32 %v1122
    %vm1130 = vweird.f32 %v1124
    %vm1131 = vmor %vm1129, %vm1130
    %v1132 = vsel %vm1131, %v1124, %v1128
    %v1133 = vand.u32 2147483647, %v1122
    %vm1134 = vcmp.eq.f32.partialorder %v1133, 8.507059e+37
    %v1135 = vand.u32 %v1122, 2147483648
    %v1136 = vor.u32 1.1754944e-38, %v1135
    %v1137 = vsel %vm1134, %v1136, %v1132
    %v1138 = vmul.f32 1.0, %v1137
    %v1139 = vrcp.pop %v1123
    %v1140 = vmul.f32 %v1123, %v1139
    %v1141 = vsub.f32 1.0, %v1140
    %v1142 = vmul.f32 %v1139, %v1141
    %v1143 = vadd.f32 %v1139, %v1142
    %vm1144 = vweird.f32 %v1123
    %vm1145 = vweird.f32 %v1139
    %vm1146 = vmor %vm1144, %vm1145
    %v1147 = vsel %vm1146, %v1139, %v1143
    %v1148 = vand.u32 2147483647, %v1123
    %vm1149 = vcmp.eq.f32.partialorder %v1148, 8.507059e+37
    %v1150 = vand.u32 %v1123, 2147483648
    %v1151 = vor.u32 1.1754944e-38, %v1150
    %v1152 = vsel %vm1149, %v1151, %v1147
    %v1153 = vmul.f32 1.0, %v1152
    %v1154 = vmul.f32 %v1153, 2.0
    %v1155 = vsub.f32 %v1154, 1.0
    %v1157 = vrot.slane %v1060, 7
    %v1159 = vmul.f32 %v1138, %v1157
    %v1160 = vmul.f32 %v1138, %v1155
    %1162 = vrot.lane.b32.xlu0 %v1160, 64
    %v1163 = vpop.permute.xlu0 %1162
    %v1165 = vadd.f32 %v1159, %v1163
    %v1166 = vtanh.pop %v1165
    %v1167 = vmul.f32 %v1153, %v1166
    %v1169 = vrot.slane %v1167, 1
    %1170 = vrot.lane.b32.xlu0 %v1169, 64
    %v1171 = vpop.permute.xlu0 %1170
    %v1172 = vsel %vm117, %v1171, 0
    %1174 = vmatpush.msra.mxu0 0.0
    %1175 = vmatpush.msra.mxu0 0.0
    %1176 = vmatpush.msra.mxu0 0.0
    %1177 = vmatpush.msra.mxu0 0.0
    %1178 = vmatpush.msra.mxu0 0.0
    %1179 = vmatpush.msra.mxu0 0.0
    %1180 = vmatpush.msra.mxu0 0.0
    %1181 = vmatpush.msra.mxu0 0.0
    %1182 = vmatpush.msra.mxu0 %v41
    %1183 = vmatpush.msra.mxu0 %v39
    %1184 = vmatpush.msra.mxu0 %v37
    %1185 = vmatpush.msra.mxu0 %v35
    %1186 = vmatpush.msra.mxu0 %v33
    %1187 = vmatpush.msra.mxu0 %v31
    %1188 = vmatpush.msra.mxu0 %v29
    %1189 = vmatpush.msra.mxu0 %v27
    %1190 = vmatmul.f32.gmra.mxu0 %v1172
    %v1191 = vpop.f32.mrf.mxu0
    %v1192 = vadd.f32 0.0, %v1191
    %1193 = vdwg.mxu0
    %1194 = vmatpush.msra.mxu0 0.0
    %1195 = vmatpush.msra.mxu0 0.0
    %1196 = vmatpush.msra.mxu0 0.0
    %1197 = vmatpush.msra.mxu0 0.0
    %1198 = vmatpush.msra.mxu0 0.0
    %1199 = vmatpush.msra.mxu0 0.0
    %1200 = vmatpush.msra.mxu0 0.0
    %1201 = vmatpush.msra.mxu0 0.0
    %1202 = vmatpush.msra.mxu0 %v42
    %1203 = vmatpush.msra.mxu0 %v40
    %1204 = vmatpush.msra.mxu0 %v38
    %1205 = vmatpush.msra.mxu0 %v36
    %1206 = vmatpush.msra.mxu0 %v34
    %1207 = vmatpush.msra.mxu0 %v32
    %1208 = vmatpush.msra.mxu0 %v30
    %1209 = vmatpush.msra.mxu0 %v28
    %1210 = vmatmul.f32.gmra.mxu0 %v1172
    %v1211 = vpop.f32.mrf.mxu0
    %v1212 = vadd.f32 0.0, %v1211
    %1213 = vdwg.mxu0
    %v1216 = vrot.slane %v1192, 6
    %v1217 = vrot.slane %v1212, 6
    %v1220 = vadd.f32 %v89, %v1216
    %v1221 = vadd.f32 %v112, %v1217
    %v1222 = vxor.u32 %v1220, 2147483648
    %v1223 = vxor.u32 %v1221, 2147483648
    %v1224 = vmul.f32 %v1222, 1.442695
    %v1225 = vpow.pop %v1224
    %v1226 = vmul.f32 %v1223, 1.442695
    %v1227 = vpow.pop %v1226
    %v1228 = vadd.f32 %v1225, 1.0
    %v1229 = vadd.f32 %v1227, 1.0
    %v1230 = vrcp.pop %v1228
    %v1231 = vmul.f32 %v1228, %v1230
    %v1232 = vsub.f32 1.0, %v1231
    %v1233 = vmul.f32 %v1230, %v1232
    %v1234 = vadd.f32 %v1230, %v1233
    %vm1235 = vweird.f32 %v1228
    %vm1236 = vweird.f32 %v1230
    %vm1237 = vmor %vm1235, %vm1236
    %v1238 = vsel %vm1237, %v1230, %v1234
    %v1239 = vand.u32 2147483647, %v1228
    %vm1240 = vcmp.eq.f32.partialorder %v1239, 8.507059e+37
    %v1241 = vand.u32 %v1228, 2147483648
    %v1242 = vor.u32 1.1754944e-38, %v1241
    %v1243 = vsel %vm1240, %v1242, %v1238
    %v1244 = vmul.f32 1.0, %v1243
    %v1245 = vrcp.pop %v1229
    %v1246 = vmul.f32 %v1229, %v1245
    %v1247 = vsub.f32 1.0, %v1246
    %v1248 = vmul.f32 %v1245, %v1247
    %v1249 = vadd.f32 %v1245, %v1248
    %vm1250 = vweird.f32 %v1229
    %vm1251 = vweird.f32 %v1245
    %vm1252 = vmor %vm1250, %vm1251
    %v1253 = vsel %vm1252, %v1245, %v1249
    %v1254 = vand.u32 2147483647, %v1229
    %vm1255 = vcmp.eq.f32.partialorder %v1254, 8.507059e+37
    %v1256 = vand.u32 %v1229, 2147483648
    %v1257 = vor.u32 1.1754944e-38, %v1256
    %v1258 = vsel %vm1255, %v1257, %v1253
    %v1259 = vmul.f32 1.0, %v1258
    %v1260 = vmul.f32 %v1259, 2.0
    %v1261 = vsub.f32 %v1260, 1.0
    %v1263 = vrot.slane %v1165, 7
    %v1265 = vmul.f32 %v1244, %v1263
    %v1266 = vmul.f32 %v1244, %v1261
    %1268 = vrot.lane.b32.xlu0 %v1266, 64
    %v1269 = vpop.permute.xlu0 %1268
    %v1271 = vadd.f32 %v1265, %v1269
    %v1272 = vtanh.pop %v1271
    %v1273 = vmul.f32 %v1259, %v1272
    %v1275 = vrot.slane %v1273, 2
    %1276 = vrot.lane.b32.xlu0 %v1275, 64
    %v1277 = vpop.permute.xlu0 %1276
    %v1278 = vsel %vm117, %v1277, 0
    %1280 = vmatpush.msra.mxu0 0.0
    %1281 = vmatpush.msra.mxu0 0.0
    %1282 = vmatpush.msra.mxu0 0.0
    %1283 = vmatpush.msra.mxu0 0.0
    %1284 = vmatpush.msra.mxu0 0.0
    %1285 = vmatpush.msra.mxu0 0.0
    %1286 = vmatpush.msra.mxu0 0.0
    %1287 = vmatpush.msra.mxu0 0.0
    %1288 = vmatpush.msra.mxu0 %v41
    %1289 = vmatpush.msra.mxu0 %v39
    %1290 = vmatpush.msra.mxu0 %v37
    %1291 = vmatpush.msra.mxu0 %v35
    %1292 = vmatpush.msra.mxu0 %v33
    %1293 = vmatpush.msra.mxu0 %v31
    %1294 = vmatpush.msra.mxu0 %v29
    %1295 = vmatpush.msra.mxu0 %v27
    %1296 = vmatmul.f32.gmra.mxu0 %v1278
    %v1297 = vpop.f32.mrf.mxu0
    %v1298 = vadd.f32 0.0, %v1297
    %1299 = vdwg.mxu0
    %1300 = vmatpush.msra.mxu0 0.0
    %1301 = vmatpush.msra.mxu0 0.0
    %1302 = vmatpush.msra.mxu0 0.0
    %1303 = vmatpush.msra.mxu0 0.0
    %1304 = vmatpush.msra.mxu0 0.0
    %1305 = vmatpush.msra.mxu0 0.0
    %1306 = vmatpush.msra.mxu0 0.0
    %1307 = vmatpush.msra.mxu0 0.0
    %1308 = vmatpush.msra.mxu0 %v42
    %1309 = vmatpush.msra.mxu0 %v40
    %1310 = vmatpush.msra.mxu0 %v38
    %1311 = vmatpush.msra.mxu0 %v36
    %1312 = vmatpush.msra.mxu0 %v34
    %1313 = vmatpush.msra.mxu0 %v32
    %1314 = vmatpush.msra.mxu0 %v30
    %1315 = vmatpush.msra.mxu0 %v28
    %1316 = vmatmul.f32.gmra.mxu0 %v1278
    %v1317 = vpop.f32.mrf.mxu0
    %v1318 = vadd.f32 0.0, %v1317
    %1319 = vdwg.mxu0
    %v1322 = vrot.slane %v1298, 5
    %v1323 = vrot.slane %v1318, 5
    %v1326 = vadd.f32 %v89, %v1322
    %v1327 = vadd.f32 %v112, %v1323
    %v1328 = vxor.u32 %v1326, 2147483648
    %v1329 = vxor.u32 %v1327, 2147483648
    %v1330 = vmul.f32 %v1328, 1.442695
    %v1331 = vpow.pop %v1330
    %v1332 = vmul.f32 %v1329, 1.442695
    %v1333 = vpow.pop %v1332
    %v1334 = vadd.f32 %v1331, 1.0
    %v1335 = vadd.f32 %v1333, 1.0
    %v1336 = vrcp.pop %v1334
    %v1337 = vmul.f32 %v1334, %v1336
    %v1338 = vsub.f32 1.0, %v1337
    %v1339 = vmul.f32 %v1336, %v1338
    %v1340 = vadd.f32 %v1336, %v1339
    %vm1341 = vweird.f32 %v1334
    %vm1342 = vweird.f32 %v1336
    %vm1343 = vmor %vm1341, %vm1342
    %v1344 = vsel %vm1343, %v1336, %v1340
    %v1345 = vand.u32 2147483647, %v1334
    %vm1346 = vcmp.eq.f32.partialorder %v1345, 8.507059e+37
    %v1347 = vand.u32 %v1334, 2147483648
    %v1348 = vor.u32 1.1754944e-38, %v1347
    %v1349 = vsel %vm1346, %v1348, %v1344
    %v1350 = vmul.f32 1.0, %v1349
    %v1351 = vrcp.pop %v1335
    %v1352 = vmul.f32 %v1335, %v1351
    %v1353 = vsub.f32 1.0, %v1352
    %v1354 = vmul.f32 %v1351, %v1353
    %v1355 = vadd.f32 %v1351, %v1354
    %vm1356 = vweird.f32 %v1335
    %vm1357 = vweird.f32 %v1351
    %vm1358 = vmor %vm1356, %vm1357
    %v1359 = vsel %vm1358, %v1351, %v1355
    %v1360 = vand.u32 2147483647, %v1335
    %vm1361 = vcmp.eq.f32.partialorder %v1360, 8.507059e+37
    %v1362 = vand.u32 %v1335, 2147483648
    %v1363 = vor.u32 1.1754944e-38, %v1362
    %v1364 = vsel %vm1361, %v1363, %v1359
    %v1365 = vmul.f32 1.0, %v1364
    %v1366 = vmul.f32 %v1365, 2.0
    %v1367 = vsub.f32 %v1366, 1.0
    %v1369 = vrot.slane %v1271, 7
    %v1371 = vmul.f32 %v1350, %v1369
    %v1372 = vmul.f32 %v1350, %v1367
    %1374 = vrot.lane.b32.xlu0 %v1372, 64
    %v1375 = vpop.permute.xlu0 %1374
    %v1377 = vadd.f32 %v1371, %v1375
    %v1378 = vtanh.pop %v1377
    %v1379 = vmul.f32 %v1365, %v1378
    %v1381 = vrot.slane %v1379, 3
    %1382 = vrot.lane.b32.xlu0 %v1381, 64
    %v1383 = vpop.permute.xlu0 %1382
    %v1384 = vsel %vm117, %v1383, 0
    %1386 = vmatpush.msra.mxu0 0.0
    %1387 = vmatpush.msra.mxu0 0.0
    %1388 = vmatpush.msra.mxu0 0.0
    %1389 = vmatpush.msra.mxu0 0.0
    %1390 = vmatpush.msra.mxu0 0.0
    %1391 = vmatpush.msra.mxu0 0.0
    %1392 = vmatpush.msra.mxu0 0.0
    %1393 = vmatpush.msra.mxu0 0.0
    %1394 = vmatpush.msra.mxu0 %v41
    %1395 = vmatpush.msra.mxu0 %v39
    %1396 = vmatpush.msra.mxu0 %v37
    %1397 = vmatpush.msra.mxu0 %v35
    %1398 = vmatpush.msra.mxu0 %v33
    %1399 = vmatpush.msra.mxu0 %v31
    %1400 = vmatpush.msra.mxu0 %v29
    %1401 = vmatpush.msra.mxu0 %v27
    %1402 = vmatmul.f32.gmra.mxu0 %v1384
    %v1403 = vpop.f32.mrf.mxu0
    %v1404 = vadd.f32 0.0, %v1403
    %1405 = vdwg.mxu0
    %1406 = vmatpush.msra.mxu0 0.0
    %1407 = vmatpush.msra.mxu0 0.0
    %1408 = vmatpush.msra.mxu0 0.0
    %1409 = vmatpush.msra.mxu0 0.0
    %1410 = vmatpush.msra.mxu0 0.0
    %1411 = vmatpush.msra.mxu0 0.0
    %1412 = vmatpush.msra.mxu0 0.0
    %1413 = vmatpush.msra.mxu0 0.0
    %1414 = vmatpush.msra.mxu0 %v42
    %1415 = vmatpush.msra.mxu0 %v40
    %1416 = vmatpush.msra.mxu0 %v38
    %1417 = vmatpush.msra.mxu0 %v36
    %1418 = vmatpush.msra.mxu0 %v34
    %1419 = vmatpush.msra.mxu0 %v32
    %1420 = vmatpush.msra.mxu0 %v30
    %1421 = vmatpush.msra.mxu0 %v28
    %1422 = vmatmul.f32.gmra.mxu0 %v1384
    %v1423 = vpop.f32.mrf.mxu0
    %v1424 = vadd.f32 0.0, %v1423
    %1425 = vdwg.mxu0
    %v1428 = vrot.slane %v1404, 4
    %v1429 = vrot.slane %v1424, 4
    %v1432 = vadd.f32 %v89, %v1428
    %v1433 = vadd.f32 %v112, %v1429
    %v1434 = vxor.u32 %v1432, 2147483648
    %v1435 = vxor.u32 %v1433, 2147483648
    %v1436 = vmul.f32 %v1434, 1.442695
    %v1437 = vpow.pop %v1436
    %v1438 = vmul.f32 %v1435, 1.442695
    %v1439 = vpow.pop %v1438
    %v1440 = vadd.f32 %v1437, 1.0
    %v1441 = vadd.f32 %v1439, 1.0
    %v1442 = vrcp.pop %v1440
    %v1443 = vmul.f32 %v1440, %v1442
    %v1444 = vsub.f32 1.0, %v1443
    %v1445 = vmul.f32 %v1442, %v1444
    %v1446 = vadd.f32 %v1442, %v1445
    %vm1447 = vweird.f32 %v1440
    %vm1448 = vweird.f32 %v1442
    %vm1449 = vmor %vm1447, %vm1448
    %v1450 = vsel %vm1449, %v1442, %v1446
    %v1451 = vand.u32 2147483647, %v1440
    %vm1452 = vcmp.eq.f32.partialorder %v1451, 8.507059e+37
    %v1453 = vand.u32 %v1440, 2147483648
    %v1454 = vor.u32 1.1754944e-38, %v1453
    %v1455 = vsel %vm1452, %v1454, %v1450
    %v1456 = vmul.f32 1.0, %v1455
    %v1457 = vrcp.pop %v1441
    %v1458 = vmul.f32 %v1441, %v1457
    %v1459 = vsub.f32 1.0, %v1458
    %v1460 = vmul.f32 %v1457, %v1459
    %v1461 = vadd.f32 %v1457, %v1460
    %vm1462 = vweird.f32 %v1441
    %vm1463 = vweird.f32 %v1457
    %vm1464 = vmor %vm1462, %vm1463
    %v1465 = vsel %vm1464, %v1457, %v1461
    %v1466 = vand.u32 2147483647, %v1441
    %vm1467 = vcmp.eq.f32.partialorder %v1466, 8.507059e+37
    %v1468 = vand.u32 %v1441, 2147483648
    %v1469 = vor.u32 1.1754944e-38, %v1468
    %v1470 = vsel %vm1467, %v1469, %v1465
    %v1471 = vmul.f32 1.0, %v1470
    %v1472 = vmul.f32 %v1471, 2.0
    %v1473 = vsub.f32 %v1472, 1.0
    %v1475 = vrot.slane %v1377, 7
    %v1477 = vmul.f32 %v1456, %v1475
    %v1478 = vmul.f32 %v1456, %v1473
    %1480 = vrot.lane.b32.xlu0 %v1478, 64
    %v1481 = vpop.permute.xlu0 %1480
    %v1483 = vadd.f32 %v1477, %v1481
    %v1484 = vtanh.pop %v1483
    %v1485 = vmul.f32 %v1471, %v1484
    %v1487 = vrot.slane %v1485, 4
    %1488 = vrot.lane.b32.xlu0 %v1487, 64
    %v1489 = vpop.permute.xlu0 %1488
    %v1490 = vsel %vm117, %v1489, 0
    %1492 = vmatpush.msra.mxu0 0.0
    %1493 = vmatpush.msra.mxu0 0.0
    %1494 = vmatpush.msra.mxu0 0.0
    %1495 = vmatpush.msra.mxu0 0.0
    %1496 = vmatpush.msra.mxu0 0.0
    %1497 = vmatpush.msra.mxu0 0.0
    %1498 = vmatpush.msra.mxu0 0.0
    %1499 = vmatpush.msra.mxu0 0.0
    %1500 = vmatpush.msra.mxu0 %v41
    %1501 = vmatpush.msra.mxu0 %v39
    %1502 = vmatpush.msra.mxu0 %v37
    %1503 = vmatpush.msra.mxu0 %v35
    %1504 = vmatpush.msra.mxu0 %v33
    %1505 = vmatpush.msra.mxu0 %v31
    %1506 = vmatpush.msra.mxu0 %v29
    %1507 = vmatpush.msra.mxu0 %v27
    %1508 = vmatmul.f32.gmra.mxu0 %v1490
    %v1509 = vpop.f32.mrf.mxu0
    %v1510 = vadd.f32 0.0, %v1509
    %1511 = vdwg.mxu0
    %1512 = vmatpush.msra.mxu0 0.0
    %1513 = vmatpush.msra.mxu0 0.0
    %1514 = vmatpush.msra.mxu0 0.0
    %1515 = vmatpush.msra.mxu0 0.0
    %1516 = vmatpush.msra.mxu0 0.0
    %1517 = vmatpush.msra.mxu0 0.0
    %1518 = vmatpush.msra.mxu0 0.0
    %1519 = vmatpush.msra.mxu0 0.0
    %1520 = vmatpush.msra.mxu0 %v42
    %1521 = vmatpush.msra.mxu0 %v40
    %1522 = vmatpush.msra.mxu0 %v38
    %1523 = vmatpush.msra.mxu0 %v36
    %1524 = vmatpush.msra.mxu0 %v34
    %1525 = vmatpush.msra.mxu0 %v32
    %1526 = vmatpush.msra.mxu0 %v30
    %1527 = vmatpush.msra.mxu0 %v28
    %1528 = vmatmul.f32.gmra.mxu0 %v1490
    %v1529 = vpop.f32.mrf.mxu0
    %v1530 = vadd.f32 0.0, %v1529
    %1531 = vdwg.mxu0
    %v1534 = vrot.slane %v1510, 3
    %v1535 = vrot.slane %v1530, 3
    %v1538 = vadd.f32 %v89, %v1534
    %v1539 = vadd.f32 %v112, %v1535
    %v1540 = vxor.u32 %v1538, 2147483648
    %v1541 = vxor.u32 %v1539, 2147483648
    %v1542 = vmul.f32 %v1540, 1.442695
    %v1543 = vpow.pop %v1542
    %v1544 = vmul.f32 %v1541, 1.442695
    %v1545 = vpow.pop %v1544
    %v1546 = vadd.f32 %v1543, 1.0
    %v1547 = vadd.f32 %v1545, 1.0
    %v1548 = vrcp.pop %v1546
    %v1549 = vmul.f32 %v1546, %v1548
    %v1550 = vsub.f32 1.0, %v1549
    %v1551 = vmul.f32 %v1548, %v1550
    %v1552 = vadd.f32 %v1548, %v1551
    %vm1553 = vweird.f32 %v1546
    %vm1554 = vweird.f32 %v1548
    %vm1555 = vmor %vm1553, %vm1554
    %v1556 = vsel %vm1555, %v1548, %v1552
    %v1557 = vand.u32 2147483647, %v1546
    %vm1558 = vcmp.eq.f32.partialorder %v1557, 8.507059e+37
    %v1559 = vand.u32 %v1546, 2147483648
    %v1560 = vor.u32 1.1754944e-38, %v1559
    %v1561 = vsel %vm1558, %v1560, %v1556
    %v1562 = vmul.f32 1.0, %v1561
    %v1563 = vrcp.pop %v1547
    %v1564 = vmul.f32 %v1547, %v1563
    %v1565 = vsub.f32 1.0, %v1564
    %v1566 = vmul.f32 %v1563, %v1565
    %v1567 = vadd.f32 %v1563, %v1566
    %vm1568 = vweird.f32 %v1547
    %vm1569 = vweird.f32 %v1563
    %vm1570 = vmor %vm1568, %vm1569
    %v1571 = vsel %vm1570, %v1563, %v1567
    %v1572 = vand.u32 2147483647, %v1547
    %vm1573 = vcmp.eq.f32.partialorder %v1572, 8.507059e+37
    %v1574 = vand.u32 %v1547, 2147483648
    %v1575 = vor.u32 1.1754944e-38, %v1574
    %v1576 = vsel %vm1573, %v1575, %v1571
    %v1577 = vmul.f32 1.0, %v1576
    %v1578 = vmul.f32 %v1577, 2.0
    %v1579 = vsub.f32 %v1578, 1.0
    %v1581 = vrot.slane %v1483, 7
    %v1583 = vmul.f32 %v1562, %v1581
    %v1584 = vmul.f32 %v1562, %v1579
    %1586 = vrot.lane.b32.xlu0 %v1584, 64
    %v1587 = vpop.permute.xlu0 %1586
    %v1589 = vadd.f32 %v1583, %v1587
    %v1590 = vtanh.pop %v1589
    %v1591 = vmul.f32 %v1577, %v1590
    %v1593 = vrot.slane %v1591, 5
    %1594 = vrot.lane.b32.xlu0 %v1593, 64
    %v1595 = vpop.permute.xlu0 %1594
    %v1596 = vsel %vm117, %v1595, 0
    %1598 = vmatpush.msra.mxu0 0.0
    %1599 = vmatpush.msra.mxu0 0.0
    %1600 = vmatpush.msra.mxu0 0.0
    %1601 = vmatpush.msra.mxu0 0.0
    %1602 = vmatpush.msra.mxu0 0.0
    %1603 = vmatpush.msra.mxu0 0.0
    %1604 = vmatpush.msra.mxu0 0.0
    %1605 = vmatpush.msra.mxu0 0.0
    %1606 = vmatpush.msra.mxu0 %v41
    %1607 = vmatpush.msra.mxu0 %v39
    %1608 = vmatpush.msra.mxu0 %v37
    %1609 = vmatpush.msra.mxu0 %v35
    %1610 = vmatpush.msra.mxu0 %v33
    %1611 = vmatpush.msra.mxu0 %v31
    %1612 = vmatpush.msra.mxu0 %v29
    %1613 = vmatpush.msra.mxu0 %v27
    %1614 = vmatmul.f32.gmra.mxu0 %v1596
    %v1615 = vpop.f32.mrf.mxu0
    %v1616 = vadd.f32 0.0, %v1615
    %1617 = vdwg.mxu0
    %1618 = vmatpush.msra.mxu0 0.0
    %1619 = vmatpush.msra.mxu0 0.0
    %1620 = vmatpush.msra.mxu0 0.0
    %1621 = vmatpush.msra.mxu0 0.0
    %1622 = vmatpush.msra.mxu0 0.0
    %1623 = vmatpush.msra.mxu0 0.0
    %1624 = vmatpush.msra.mxu0 0.0
    %1625 = vmatpush.msra.mxu0 0.0
    %1626 = vmatpush.msra.mxu0 %v42
    %1627 = vmatpush.msra.mxu0 %v40
    %1628 = vmatpush.msra.mxu0 %v38
    %1629 = vmatpush.msra.mxu0 %v36
    %1630 = vmatpush.msra.mxu0 %v34
    %1631 = vmatpush.msra.mxu0 %v32
    %1632 = vmatpush.msra.mxu0 %v30
    %1633 = vmatpush.msra.mxu0 %v28
    %1634 = vmatmul.f32.gmra.mxu0 %v1596
    %v1635 = vpop.f32.mrf.mxu0
    %v1636 = vadd.f32 0.0, %v1635
    %1637 = vdwg.mxu0
    %v1640 = vrot.slane %v1636, 7
    %vm1641 = vcmask 1040384
    %v1642 = vsel %vm1641, %v1616, %v1640
    %v1644 = vadd.f32 %v46, %v1642
    %v1645 = vxor.u32 %v1644, 2147483648
    %v1646 = vmul.f32 %v1645, 1.442695
    %v1647 = vpow.pop %v1646
    %v1648 = vadd.f32 %v1647, 1.0
    %v1649 = vrcp.pop %v1648
    %v1650 = vmul.f32 %v1648, %v1649
    %v1651 = vsub.f32 1.0, %v1650
    %v1652 = vmul.f32 %v1649, %v1651
    %v1653 = vadd.f32 %v1649, %v1652
    %vm1654 = vweird.f32 %v1648
    %vm1655 = vweird.f32 %v1649
    %vm1656 = vmor %vm1654, %vm1655
    %v1657 = vsel %vm1656, %v1649, %v1653
    %v1658 = vand.u32 2147483647, %v1648
    %vm1659 = vcmp.eq.f32.partialorder %v1658, 8.507059e+37
    %v1660 = vand.u32 %v1648, 2147483648
    %v1661 = vor.u32 1.1754944e-38, %v1660
    %v1662 = vsel %vm1659, %v1661, %v1657
    %v1663 = vmul.f32 1.0, %v1662
    %v1665 = vrot.slane %v1663, 1
    %v1667 = vmul.f32 %v1665, 2.0
    %v1668 = vsub.f32 %v1667, 1.0
    %1670 = vst [vmem:[#allocation1] sm:$0xff] %v1589
    %s1671 = scalar_lea.vmem [#allocation1], 5
    %v1672 = vld [vmem:[%s1671] ss:$9 sm:$0xff]
    %v1674 = vmul.f32 %v1663, %v1672
    %v1675 = vmul.f32 %v1663, %v1668
    %1677 = vrot.lane.b32.xlu0 %v1675, 64
    %v1678 = vpop.permute.xlu0 %1677
    %v1680 = vadd.f32 %v1674, %v1678
    %v1681 = vtanh.pop %v1680
    %1682 = vrot.lane.b32.xlu0 %v1663, 64
    %v1683 = vpop.permute.xlu0 %1682
    %v1684 = vrot.slane %v1683, 1
    %1687 = vrot.lane.b32.xlu0 %v1681, 64
    %v1688 = vpop.permute.xlu0 %1687
    %v1690 = vmul.f32 %v1684, %v1688
    %1691 = vrot.lane.b32.xlu0 %v1591, 64
    %v1692 = vpop.permute.xlu0 %1691
    %vm1694 = vcmask 259077
    %1695 = vst.msk [vmem:[%s2 - $0x5] sm:$0x20] %vm1694, %v1692
    %v1697 = vperm.slane %v1690, 0
    %1698 = vrot.lane.b32.xlu0 %v1697, 96
    %v1699 = vpop.permute.xlu0 %1698
    %vm1701 = vcmask 253952
    %1702 = vst.msk [vmem:[%s2 + $0x1] sm:$0x1] %vm1701, %v1699
    %1703 = vrot.lane.b32.xlu0 %v1589, 64
    %v1704 = vpop.permute.xlu0 %1703
    %1706 = vst.msk [vmem:[%s2 - $0x3] sm:$0x20] %vm1694, %v1704
    %v1708 = vperm.slane %v1680, 0
    %1709 = vrot.lane.b32.xlu0 %v1708, 32
    %v1710 = vpop.permute.xlu0 %1709
    %1712 = vst.msk [vmem:[%s2 + $0x3] sm:$0x1] %vm1701, %v1710
    // Predicated region
    $region14: #{encoder_forward.1} parent=1 // pred_check
      _
    $region15: #{encoder_forward.1} parent=1 // pred_check_branch
      %1714 = sbr.rel (0) target = $region17
    $region16: #{encoder_forward.1} parent=1 // pred_region
      _
    $region17: #{encoder_forward.1} parent=1 // pred_fallthru
      _
    // Predicated region
    $region18: #{encoder_forward.1} parent=1 // pred_check
      _
    $region19: #{encoder_forward.1} parent=1 // pred_check_branch
      %1716 = sbr.rel (0) target = $region21
    $region20: #{encoder_forward.1} parent=1 // pred_region
      _
    $region21: #{encoder_forward.1} parent=1 // pred_fallthru
      _
    %1717 = vsyncpa [#allocation3], 1

</llo_original>
